<compile_context>
chip_gen: v7x
topology: tpu7x:2x2x1
jax: 0.10.0
libtpu: 0.0.40
codegen_flags: <defaults>
</compile_context>

<pallas_src>
import jax
import jax.numpy as jnp
from jax.experimental import pallas as pl
from jax.experimental.pallas import tpu as pltpu

BN_EPS = 1e-5
LANE = 128
SUBLANE = 8


def _round_up(x, m):
    return (x + m - 1) // m * m


def _choose_tiling(B, tm_max=512):
    """Pick (tm, padded_B, num_tiles): >=2 grid steps (both v7x TCs get work),
    tm a sublane multiple, and padded_B a near-divisor multiple of round_up(B,8)."""
    B8 = _round_up(B, SUBLANE)
    n = max(2, pl.cdiv(B8, tm_max))
    tm = _round_up(pl.cdiv(B8, n), SUBLANE)
    return tm, n * tm, n


def fusion_head_kernel(alpha_ref, feat_ref, sim_ref,
                       w1a_ref, w1b_ref, b1_ref, w2_ref, b2_ref, out_ref):
    # In-kernel "concat": fc1(cat(feat, sim)) == feat @ w1[:512] + sim @ w1[512:].
    # Activations arrive f32 (as produced upstream); cast to bf16 here (MXU operand),
    # accumulate in f32 on the MXU. BN1 is folded into w1/b1.
    feat = feat_ref[...].astype(jnp.bfloat16)                      # [tm, 512]
    sim = sim_ref[...].astype(jnp.bfloat16)                        # [tm, NEW]
    y = jnp.dot(feat, w1a_ref[...], preferred_element_type=jnp.float32)
    y = y + jnp.dot(sim, w1b_ref[...], preferred_element_type=jnp.float32)
    y = y + b1_ref[...]                                            # [tm, DP1] f32

    # PReLU(1), single shared alpha (torch default). Bias add stays f32; the select
    # runs in bf16 (fc2's MXU operand dtype anyway) to halve VPU work on the
    # lane-padded [tm, 640] tile. Padded lanes stay exactly 0 (zero w1 cols/bias).
    a1 = alpha_ref[0].astype(jnp.bfloat16)
    yb = y.astype(jnp.bfloat16)
    yb = jnp.where(yb >= 0, yb, a1 * yb)
    # drop1: identity at inference.

    # fc2 (+ folded BN2); padded w2 input rows are zero, so the lane padding is exact.
    z = jnp.dot(yb, w2_ref[...], preferred_element_type=jnp.float32) + b2_ref[...]
    a2 = alpha_ref[1]
    z = jnp.where(z >= 0, z, a2 * z)
    # drop2: identity at inference; fc3 is never applied in the reference forward.
    out_ref[...] = z.astype(out_ref.dtype)                         # bf16 store (lane-dense)


def fusion_head(features, similarity_features, params, tm_max=512,
                out_dtype=jnp.bfloat16):
    """features: [B, 512] f32, similarity_features: [B, NEW] f32.
    Returns [B, intermediate_size] in out_dtype (default bf16)."""
    B, FEAT = features.shape
    _, NEW = similarity_features.shape
    DP1 = params["w1a"].shape[1]          # lane-padded hidden dim (e.g. 544 -> 640)
    INTER = params["w2"].shape[1]         # 512

    tm, BP, n = _choose_tiling(B, tm_max)
    if BP != B:
        # Rows-only pad (no lane pad, no cast, no concat in the wrapper).
        features = jnp.pad(features, ((0, BP - B), (0, 0)))
        similarity_features = jnp.pad(similarity_features, ((0, BP - B), (0, 0)))

    grid_spec = pltpu.PrefetchScalarGridSpec(
        num_scalar_prefetch=0,
        grid=(n,),
        in_specs=[
            pl.BlockSpec(memory_space=pltpu.MemorySpace.SMEM),   # alphas (2,)
            pl.BlockSpec((tm, FEAT), lambda i: (i, 0)),          # features tile (f32)
            pl.BlockSpec((tm, NEW), lambda i: (i, 0)),           # similarity tile (f32)
            pl.BlockSpec((FEAT, DP1), lambda i: (0, 0)),         # w1[:512]  (VMEM-resident)
            pl.BlockSpec((NEW, DP1), lambda i: (0, 0)),          # w1[512:]  (VMEM-resident)
            pl.BlockSpec((1, DP1), lambda i: (0, 0)),            # b1 (BN1 folded)
            pl.BlockSpec((DP1, INTER), lambda i: (0, 0)),        # w2 (VMEM-resident)
            pl.BlockSpec((1, INTER), lambda i: (0, 0)),          # b2 (BN2 folded)
        ],
        out_specs=pl.BlockSpec((tm, INTER), lambda i: (i, 0)),
    )
    out = pl.pallas_call(
        fusion_head_kernel,
        out_shape=jax.ShapeDtypeStruct((BP, INTER), out_dtype),
        grid_spec=grid_spec,
        compiler_params=pltpu.CompilerParams(
            dimension_semantics=("parallel",)),   # batch tiles shard across TCs (v7x)
    )(params["alpha"], features, similarity_features,
      params["w1a"], params["w1b"], params["b1"], params["w2"], params["b2"])
    return out[:B]


def prepare_fused_params(w1, b1, g1, bt1, rm1, rv1,
                         w2, b2, g2, bt2, rm2, rv2,
                         a1, a2, feat_dim=512):
    """Fold inference BatchNorm into the preceding Linear, split fc1's weight into
    the backbone-feature part and the similarity part (kernel-side concat), pad the
    hidden dim to a lane multiple, and cast matmul operands to bf16. w are [in,out]."""
    # y = (xW + b - rm) * g/sqrt(rv+eps) + bt  ==  x (W*s) + ((b-rm)*s + bt)
    s1 = g1 * jax.lax.rsqrt(rv1 + BN_EPS)                 # [1, D]
    w1f = w1 * s1
    b1f = (b1 - rm1) * s1 + bt1
    s2 = g2 * jax.lax.rsqrt(rv2 + BN_EPS)                 # [1, INTER]
    w2f = w2 * s2
    b2f = (b2 - rm2) * s2 + bt2

    D = w1.shape[0]
    INTER = w2.shape[1]
    DP1 = _round_up(D, LANE)                              # 544 -> 640 (5 * 128)
    # Zero-padding keeps results exact: padded fc1 outputs are 0 (zero cols + zero
    # bias), PReLU(0)=0, and padded w2 input rows are 0. Keep b1 padding zero.
    w1p = jnp.zeros((D, DP1), jnp.float32).at[:, :D].set(w1f)
    b1p = jnp.zeros((1, DP1), jnp.float32).at[:, :D].set(b1f)
    w2p = jnp.zeros((DP1, INTER), jnp.float32).at[:D, :].set(w2f)

    return dict(
        w1a=w1p[:feat_dim].astype(jnp.bfloat16),          # [512, DP1]
        w1b=w1p[feat_dim:D].astype(jnp.bfloat16),         # [NEW, DP1]
        b1=b1p,                                           # [1, DP1] f32
        w2=w2p.astype(jnp.bfloat16),                      # [DP1, INTER]
        b2=b2f.astype(jnp.float32),                       # [1, INTER] f32
        alpha=jnp.stack([a1, a2]).astype(jnp.float32),    # (2,) SMEM scalars
    )


def _linear_init(kw, kb, fan_in, fan_out):
    # torch.nn.Linear default init: U(-1/sqrt(fan_in), 1/sqrt(fan_in)); stored [in, out].
    k = 1.0 / jnp.sqrt(jnp.float32(fan_in))
    w = jax.random.uniform(kw, (fan_in, fan_out), jnp.float32, -k, k)
    b = jax.random.uniform(kb, (1, fan_out), jnp.float32, -k, k)
    return w, b


if __name__ == "__main__":
    key = jax.random.PRNGKey(0)
    B, C, H, W = 2, 4, 16, 16
    NEW = 32                  # new_input_size
    FEAT = 512                # backbone feature width
    D = FEAT + NEW            # 544
    INTER = 512

    keys = jax.random.split(key, 16)
    x = jax.random.normal(keys[0], (B, C, H, W), jnp.float32)          # NCHW image
    similarity_features = jax.random.normal(keys[1], (B, NEW), jnp.float32)

    # TODO(synk): MetaIQA (ResNet18 backbone, checkpoint file) is not defined in the
    # provided snippet; substitute a deterministic stand-in feature extractor
    # (global average pool over H,W + linear projection to 512) in plain JAX glue.
    wp = jax.random.uniform(keys[2], (C, FEAT), jnp.float32, -1.0, 1.0) / jnp.sqrt(jnp.float32(C))
    features = jnp.mean(x, axis=(2, 3)) @ wp                            # [B, 512]

    # Raw (torch-equivalent) parameters, including non-trivial BN running stats.
    w1, b1 = _linear_init(keys[3], keys[4], D, D)
    w2, b2 = _linear_init(keys[5], keys[6], D, INTER)
    g1 = jax.random.uniform(keys[7], (1, D), jnp.float32, 0.8, 1.2)
    bt1 = jax.random.uniform(keys[8], (1, D), jnp.float32, -0.1, 0.1)
    rm1 = jax.random.uniform(keys[9], (1, D), jnp.float32, -0.1, 0.1)
    rv1 = jax.random.uniform(keys[10], (1, D), jnp.float32, 0.5, 1.5)
    g2 = jax.random.uniform(keys[11], (1, INTER), jnp.float32, 0.8, 1.2)
    bt2 = jax.random.uniform(keys[12], (1, INTER), jnp.float32, -0.1, 0.1)
    rm2 = jax.random.uniform(keys[13], (1, INTER), jnp.float32, -0.1, 0.1)
    rv2 = jax.random.uniform(keys[14], (1, INTER), jnp.float32, 0.5, 1.5)
    a1 = jnp.float32(0.25)    # torch PReLU default (single shared alpha)
    a2 = jnp.float32(0.25)

    params = prepare_fused_params(w1, b1, g1, bt1, rm1, rv1,
                                  w2, b2, g2, bt2, rm2, rv2, a1, a2, feat_dim=FEAT)

    out = fusion_head(features, similarity_features, params)
    out = jax.block_until_ready(out)
    assert out.shape == (B, INTER)
    assert out.dtype == jnp.bfloat16
    out_f32 = out.astype(jnp.float32)

    # Reference 1: mirror the kernel math exactly (same folded bf16 params, split
    # matmul, bf16 PReLU, bf16 output) in plain JAX — checks kernel plumbing.
    fb = features.astype(jnp.bfloat16)
    sb = similarity_features.astype(jnp.bfloat16)
    y = (jnp.dot(fb, params["w1a"], preferred_element_type=jnp.float32)
         + jnp.dot(sb, params["w1b"], preferred_element_type=jnp.float32)
         + params["b1"])
    yb = y.astype(jnp.bfloat16)
    yb = jnp.where(yb >= 0, yb, params["alpha"][0].astype(jnp.bfloat16) * yb)
    z = jnp.dot(yb, params["w2"], preferred_element_type=jnp.float32) + params["b2"]
    z = jnp.where(z >= 0, z, params["alpha"][1] * z)
    expected_bf16 = z.astype(jnp.bfloat16).astype(jnp.float32)
    assert jnp.allclose(out_f32, expected_bf16, atol=1e-2, rtol=1e-2)

    # Reference 2: full-precision, unfolded module math (torch.cat + fc/bn/prelu);
    # loose tolerance accounts for the bf16 weight/activation/output casts.
    h = jnp.concatenate([features, similarity_features], axis=1)        # [B, 544]
    y = h @ w1 + b1
    y = (y - rm1) * jax.lax.rsqrt(rv1 + BN_EPS) * g1 + bt1
    y = jnp.where(y >= 0, y, a1 * y)
    y = y @ w2 + b2
    y = (y - rm2) * jax.lax.rsqrt(rv2 + BN_EPS) * g2 + bt2
    expected_f32 = jnp.where(y >= 0, y, a2 * y)
    assert jnp.allclose(out_f32, expected_f32, atol=2e-2, rtol=2e-2)

    print("KERNEL_OK")
</pallas_src>

<mosaic_0001>
module attributes {stable_mosaic.version = 11 : i64} {
  func.func @fusion_head_kernel(%arg0: i32, %arg1: memref<2xf32, #tpu.memory_space<smem>>, %arg2: memref<8x512xf32, #tpu.memory_space<vmem>>, %arg3: memref<8x32xf32, #tpu.memory_space<vmem>>, %arg4: memref<512x640xbf16, #tpu.memory_space<vmem>>, %arg5: memref<32x640xbf16, #tpu.memory_space<vmem>>, %arg6: memref<1x640xf32, #tpu.memory_space<vmem>>, %arg7: memref<640x512xbf16, #tpu.memory_space<vmem>>, %arg8: memref<1x512xf32, #tpu.memory_space<vmem>>, %arg9: memref<8x512xbf16, #tpu.memory_space<vmem>>) attributes {dimension_semantics = [#tpu.dimension_semantics<parallel>], iteration_bounds = array<i64: 2>, scalar_prefetch = 0 : i64, scratch_operands = 0 : i64, tpu.core_type = #tpu.core_type<tc>, window_params = [{transform_indices = @transform_0, window_bounds = array<i64: 2>}, {transform_indices = @transform_1, window_bounds = array<i64: 8, 512>}, {transform_indices = @transform_2, window_bounds = array<i64: 8, 32>}, {pipeline_mode = #tpu.pipeline_mode<synchronous>, transform_indices = @transform_3, window_bounds = array<i64: 512, 640>}, {pipeline_mode = #tpu.pipeline_mode<synchronous>, transform_indices = @transform_4, window_bounds = array<i64: 32, 640>}, {pipeline_mode = #tpu.pipeline_mode<synchronous>, transform_indices = @transform_5, window_bounds = array<i64: 1, 640>}, {pipeline_mode = #tpu.pipeline_mode<synchronous>, transform_indices = @transform_6, window_bounds = array<i64: 640, 512>}, {pipeline_mode = #tpu.pipeline_mode<synchronous>, transform_indices = @transform_7, window_bounds = array<i64: 1, 512>}, {transform_indices = @transform_8, window_bounds = array<i64: 8, 512>}]} {
    %c0 = arith.constant 0 : index
    %c0_0 = arith.constant 0 : index
    %0 = vector.load %arg2[%c0, %c0_0] : memref<8x512xf32, #tpu.memory_space<vmem>>, vector<8x512xf32>
    %1 = arith.truncf %0 : vector<8x512xf32> to vector<8x512xbf16>
    %c0_1 = arith.constant 0 : index
    %c0_2 = arith.constant 0 : index
    %2 = vector.load %arg3[%c0_1, %c0_2] : memref<8x32xf32, #tpu.memory_space<vmem>>, vector<8x32xf32>
    %3 = arith.truncf %2 : vector<8x32xf32> to vector<8x32xbf16>
    %c0_3 = arith.constant 0 : index
    %c0_4 = arith.constant 0 : index
    %4 = vector.load %arg4[%c0_3, %c0_4] : memref<512x640xbf16, #tpu.memory_space<vmem>>, vector<512x640xbf16>
    %cst = arith.constant dense<0.000000e+00> : vector<8x640xf32>
    %5 = tpu.matmul %1, %4, %cst {dimension_numbers = #tpu.dot_dimension_numbers<[1], [0], [0], [1], [0, 0, 1, 1], [], []>} : vector<8x512xbf16>, vector<512x640xbf16>, vector<8x640xf32> -> vector<8x640xf32>
    %c0_5 = arith.constant 0 : index
    %c0_6 = arith.constant 0 : index
    %6 = vector.load %arg5[%c0_5, %c0_6] : memref<32x640xbf16, #tpu.memory_space<vmem>>, vector<32x640xbf16>
    %cst_7 = arith.constant dense<0.000000e+00> : vector<8x640xf32>
    %7 = tpu.matmul %3, %6, %cst_7 {dimension_numbers = #tpu.dot_dimension_numbers<[1], [0], [0], [1], [0, 0, 1, 1], [], []>} : vector<8x32xbf16>, vector<32x640xbf16>, vector<8x640xf32> -> vector<8x640xf32>
    %8 = arith.addf %5, %7 : vector<8x640xf32>
    %c0_8 = arith.constant 0 : index
    %c0_9 = arith.constant 0 : index
    %9 = vector.load %arg6[%c0_8, %c0_9] : memref<1x640xf32, #tpu.memory_space<vmem>>, vector<1x640xf32>
    %10 = vector.broadcast %9 : vector<1x640xf32> to vector<8x640xf32>
    %11 = arith.addf %8, %10 : vector<8x640xf32>
    %c0_10 = arith.constant 0 : index
    %12 = memref.load %arg1[%c0_10] : memref<2xf32, #tpu.memory_space<smem>>
    %13 = arith.truncf %12 : f32 to bf16
    %14 = arith.truncf %11 : vector<8x640xf32> to vector<8x640xbf16>
    %cst_11 = arith.constant 0.000000e+00 : bf16
    %15 = vector.broadcast %cst_11 : bf16 to vector<8x640xbf16>
    %16 = arith.cmpf oge, %14, %15 : vector<8x640xbf16>
    %17 = vector.broadcast %13 : bf16 to vector<8x640xbf16>
    %18 = arith.mulf %17, %14 : vector<8x640xbf16>
    %19 = arith.select %16, %14, %18 : vector<8x640xi1>, vector<8x640xbf16>
    %c0_12 = arith.constant 0 : index
    %c0_13 = arith.constant 0 : index
    %20 = vector.load %arg7[%c0_12, %c0_13] : memref<640x512xbf16, #tpu.memory_space<vmem>>, vector<640x512xbf16>
    %cst_14 = arith.constant dense<0.000000e+00> : vector<8x512xf32>
    %21 = tpu.matmul %19, %20, %cst_14 {dimension_numbers = #tpu.dot_dimension_numbers<[1], [0], [0], [1], [0, 0, 1, 1], [], []>} : vector<8x640xbf16>, vector<640x512xbf16>, vector<8x512xf32> -> vector<8x512xf32>
    %c0_15 = arith.constant 0 : index
    %c0_16 = arith.constant 0 : index
    %22 = vector.load %arg8[%c0_15, %c0_16] : memref<1x512xf32, #tpu.memory_space<vmem>>, vector<1x512xf32>
    %23 = vector.broadcast %22 : vector<1x512xf32> to vector<8x512xf32>
    %24 = arith.addf %21, %23 : vector<8x512xf32>
    %c1 = arith.constant 1 : index
    %25 = memref.load %arg1[%c1] : memref<2xf32, #tpu.memory_space<smem>>
    %cst_17 = arith.constant 0.000000e+00 : f32
    %26 = vector.broadcast %cst_17 : f32 to vector<8x512xf32>
    %27 = arith.cmpf oge, %24, %26 : vector<8x512xf32>
    %28 = vector.broadcast %25 : f32 to vector<8x512xf32>
    %29 = arith.mulf %28, %24 : vector<8x512xf32>
    %30 = arith.select %27, %24, %29 : vector<8x512xi1>, vector<8x512xf32>
    %31 = arith.truncf %30 : vector<8x512xf32> to vector<8x512xbf16>
    %c0_18 = arith.constant 0 : index
    %c0_19 = arith.constant 0 : index
    %32 = vector.load %arg9[%c0_18, %c0_19] : memref<8x512xbf16, #tpu.memory_space<vmem>>, vector<8x512xbf16>
    tpu.vector_store %arg9[%c0_18, %c0_19], %31 {strides = array<i32>} : memref<8x512xbf16, #tpu.memory_space<vmem>>, vector<8x512xbf16>,
    return
  }
  func.func @transform_0(%arg0: i32) -> i32 {
    %c0_i32 = arith.constant 0 : i32
    %c0_i32_0 = arith.constant 0 : i32
    return %c0_i32 : i32
  }
  func.func @transform_1(%arg0: i32) -> (i32, i32) {
    %c0_i32 = arith.constant 0 : i32
    %c0_i32_0 = arith.constant 0 : i32
    return %arg0, %c0_i32 : i32, i32
  }
  func.func @transform_2(%arg0: i32) -> (i32, i32) {
    %c0_i32 = arith.constant 0 : i32
    %c0_i32_0 = arith.constant 0 : i32
    return %arg0, %c0_i32 : i32, i32
  }
  func.func @transform_3(%arg0: i32) -> (i32, i32) {
    %c0_i32 = arith.constant 0 : i32
    %c0_i32_0 = arith.constant 0 : i32
    %c0_i32_1 = arith.constant 0 : i32
    return %c0_i32, %c0_i32_0 : i32, i32
  }
  func.func @transform_4(%arg0: i32) -> (i32, i32) {
    %c0_i32 = arith.constant 0 : i32
    %c0_i32_0 = arith.constant 0 : i32
    %c0_i32_1 = arith.constant 0 : i32
    return %c0_i32, %c0_i32_0 : i32, i32
  }
  func.func @transform_5(%arg0: i32) -> (i32, i32) {
    %c0_i32 = arith.constant 0 : i32
    %c0_i32_0 = arith.constant 0 : i32
    %c0_i32_1 = arith.constant 0 : i32
    return %c0_i32, %c0_i32_0 : i32, i32
  }
  func.func @transform_6(%arg0: i32) -> (i32, i32) {
    %c0_i32 = arith.constant 0 : i32
    %c0_i32_0 = arith.constant 0 : i32
    %c0_i32_1 = arith.constant 0 : i32
    return %c0_i32, %c0_i32_0 : i32, i32
  }
  func.func @transform_7(%arg0: i32) -> (i32, i32) {
    %c0_i32 = arith.constant 0 : i32
    %c0_i32_0 = arith.constant 0 : i32
    %c0_i32_1 = arith.constant 0 : i32
    return %c0_i32, %c0_i32_0 : i32, i32
  }
  func.func @transform_8(%arg0: i32) -> (i32, i32) {
    %c0_i32 = arith.constant 0 : i32
    %c0_i32_0 = arith.constant 0 : i32
    return %arg0, %c0_i32 : i32, i32
  }
}

</mosaic_0001>

<llo_original>
// kernel: tpu_custom_call.1
$region0: #{tpu_custom_call.1}
  #allocation0 [shape = 'u32[]', space=smem, size = 0x4, offset = 0x4, fixed_abs, tag = 'smem constant byte address 0x4 - core index']
  #allocation1 [shape = 'u32[144,128]{1,0:T(1,128)}', space=vmem, size = 0x12000, scoped, tag = 'internal scratch']
  %s0 = inlined_call_operand.hbm [shape: f32[2], index: 0, kind: input, shape index: {}]
  %s1 = inlined_call_operand.hbm [shape: f32[16,512], index: 1, kind: input, shape index: {}]
  %s2 = inlined_call_operand.hbm [shape: f32[16,32], index: 2, kind: input, shape index: {}]
  %s3 = inlined_call_operand.hbm [shape: bf16[512,640], index: 3, kind: input, shape index: {}]
  %s4 = inlined_call_operand.hbm [shape: bf16[32,640], index: 4, kind: input, shape index: {}]
  %s5 = inlined_call_operand.vmem [shape: f32[1,640], index: 5, kind: input, shape index: {}]
  %s6 = inlined_call_operand.hbm [shape: bf16[640,512], index: 6, kind: input, shape index: {}]
  %s7 = inlined_call_operand.vmem [shape: f32[1,512], index: 7, kind: input, shape index: {}]
  %s8 = inlined_call_operand.hbm [shape: bf16[16,512], index: 8, kind: output, shape index: {}]
  %s9 = sld [smem:[#allocation0]]
  $region89: #{tpu_custom_call.1} parent=0
    _
  %s11 = ssub.s32 1, %s9
  %s12 = scalar_select 0, %s11, %s9
  $region1: #{tpu_custom_call.1} parent=0
    #allocation2 [shape = 'u8[512]{0}', space=smem, size = 0x200, scoped, tag = 'input window, operand 0, single buffered']
    #allocation3 [shape = 's32[2]{0}', space=sflag, size = 0x8, scoped, tag = 'scoped memory for tpu_custom_call.1']
    #allocation4 [shape = 's32[2]{0}', space=sflag, size = 0x8, scoped, tag = 'scoped memory for tpu_custom_call.1']
    #allocation5 [shape = 's32[2]{0}', space=sflag, size = 0x8, scoped, tag = 'scoped memory for tpu_custom_call.1']
    #allocation6 [shape = 'u8[32768]{0}', space=vmem, size = 0x8000, scoped, tag = 'input window, operand 1']
    #allocation7 [shape = 'u8[8192]{0}', space=vmem, size = 0x2000, scoped, tag = 'input window, operand 2']
    #allocation8 [shape = 's32[2]{0}', space=sflag, size = 0x8, scoped, tag = 'scoped memory for tpu_custom_call.1']
    #allocation9 [shape = 'u8[655360]{0}', space=vmem, size = 0xa0000, scoped, tag = 'input window, operand 3, single buffered']
    #allocation10 [shape = 'u8[40960]{0}', space=vmem, size = 0xa000, scoped, tag = 'input window, operand 4, single buffered']
    #allocation11 [shape = 's32[1]{0}', space=sflag, size = 0x4, scoped, tag = 'scoped memory for tpu_custom_call.1']
    #allocation12 [shape = 'u8[655360]{0}', space=vmem, size = 0xa0000, scoped, tag = 'input window, operand 6, single buffered']
    #allocation13 [shape = 'u8[16384]{0}', space=vmem, size = 0x4000, scoped, tag = 'output window, operand 0']
    %13 = vsyncpa [#allocation5], 0
    %14 = vsyncpa [#allocation3], 0
    %s15 = scalar_lea.sflag [#allocation3], 1
    %16 = vsyncpa %s15, 0
    %17 = vsyncpa [#allocation8], 0
    %s18 = scalar_lea.sflag [#allocation8], 1
    %19 = vsyncpa %s18, 0
    %20 = vsyncpa [#allocation11], 0
    %21 = vsyncpa [#allocation4], 0
    %s22 = scalar_lea.sflag [#allocation4], 1
    %23 = vsyncpa %s22, 0
    loop: start=0, step=1, limit=4
    $region2: #{tpu_custom_call.1} parent=1 // loop_pre_header
      _
    $region3: #{tpu_custom_call.1} parent=1 // loop_header
      %s25 = sphi 0, %s29
      %p26 = scmp.ge.s32.totalorder %s25, 4
      %s33 = sphi 0, %s33
      %s35 = sphi 0, %s33
      %s36 = sphi 0, %s35
      %s50 = sphi 0, %s36
      %s56 = sphi 0, %s58
      %s59 = sphi 0, %s56
      %s60 = sphi 0, %s59
      %s76 = sphi 0, %s60
      %s82 = sphi 0, %s84
      %s85 = sphi 0, %s82
      %s86 = sphi 0, %s85
      %s102 = sphi 0, %s86
      %s106 = sphi 0, %s106
      %s108 = sphi 0, %s106
      %s109 = sphi 0, %s108
      %s123 = sphi 0, %s109
      %s127 = sphi 0, %s127
      %s129 = sphi 0, %s127
      %s130 = sphi 0, %s129
      %s144 = sphi 0, %s130
      %s148 = sphi 0, %s148
      %s150 = sphi 0, %s148
      %s151 = sphi 0, %s150
      %s165 = sphi 0, %s151
      %s169 = sphi 0, %s169
      %s171 = sphi 0, %s169
      %s172 = sphi 0, %s171
      %s186 = sphi 0, %s172
      %s190 = sphi 0, %s190
      %s192 = sphi 0, %s190
      %s193 = sphi 0, %s192
      %s207 = sphi 0, %s193
      %s213 = sphi 0, %s215
      %s216 = sphi 0, %s213
      %s217 = sphi 0, %s216
      %s233 = sphi 0, %s217
    $region4: #{tpu_custom_call.1} parent=1 // loop_header_branch
      %28 = sbr.rel (%p26) target = $region8
    $region5: #{tpu_custom_call.1} parent=1 // loop_body
      %s30 = ssub.s32 %s25, 1
      %s31 = ssub.s32 %s25, 2
      %s32 = sadd.s32 %s25, 1
      %s34 = sadd.s32 %s33, 1
      %p37 = scmp.eq.s32.totalorder %s25, 1
      %p38 = scmp.ne.s32.totalorder %s33, %s35
      %p39 = scmp.eq.s32.totalorder %s25, 0
      %p40 = por %p38, %p39
      %p41 = scmp.ne.s32.totalorder %s33, %s35
      %p42 = scmp.eq.s32.totalorder %s30, 1
      %p43 = por %p41, %p42
      %p44 = scmp.ne.s32.totalorder %s35, %s36
      %p45 = scmp.eq.s32.totalorder %s30, 0
      %p46 = por %p44, %p45
      %p47 = scmp.ne.s32.totalorder %s35, %s36
      %p48 = scmp.eq.s32.totalorder %s31, 1
      %p49 = por %p47, %p48
      %p51 = scmp.ne.s32.totalorder %s36, %s50
      %p52 = scmp.eq.s32.totalorder %s31, 0
      %p53 = por %p51, %p52
      %s54 = ssub.s32 %s25, %s32
      %p55 = scmp.eq.s32.totalorder %s54, 0
      %s57 = sadd.s32 %s56, 1
      %s58 = scalar_select %p55, %s56, %s57
      %p61 = pneg %p55
      %p62 = scmp.eq.s32.totalorder %s25, 1
      %p63 = por %p61, %p62
      %p64 = scmp.ne.s32.totalorder %s56, %s59
      %p65 = scmp.eq.s32.totalorder %s25, 0
      %p66 = por %p64, %p65
      %p67 = scmp.ne.s32.totalorder %s56, %s59
      %p68 = scmp.eq.s32.totalorder %s30, 1
      %p69 = por %p67, %p68
      %p70 = scmp.ne.s32.totalorder %s59, %s60
      %p71 = scmp.eq.s32.totalorder %s30, 0
      %p72 = por %p70, %p71
      %p73 = scmp.ne.s32.totalorder %s59, %s60
      %p74 = scmp.eq.s32.totalorder %s31, 1
      %p75 = por %p73, %p74
      %p77 = scmp.ne.s32.totalorder %s60, %s76
      %p78 = scmp.eq.s32.totalorder %s31, 0
      %p79 = por %p77, %p78
      %s80 = ssub.s32 %s25, %s32
      %p81 = scmp.eq.s32.totalorder %s80, 0
      %s83 = sadd.s32 %s82, 1
      %s84 = scalar_select %p81, %s82, %s83
      %p87 = pneg %p81
      %p88 = scmp.eq.s32.totalorder %s25, 1
      %p89 = por %p87, %p88
      %p90 = scmp.ne.s32.totalorder %s82, %s85
      %p91 = scmp.eq.s32.totalorder %s25, 0
      %p92 = por %p90, %p91
      %p93 = scmp.ne.s32.totalorder %s82, %s85
      %p94 = scmp.eq.s32.totalorder %s30, 1
      %p95 = por %p93, %p94
      %p96 = scmp.ne.s32.totalorder %s85, %s86
      %p97 = scmp.eq.s32.totalorder %s30, 0
      %p98 = por %p96, %p97
      %p99 = scmp.ne.s32.totalorder %s85, %s86
      %p100 = scmp.eq.s32.totalorder %s31, 1
      %p101 = por %p99, %p100
      %p103 = scmp.ne.s32.totalorder %s86, %s102
      %p104 = scmp.eq.s32.totalorder %s31, 0
      %p105 = por %p103, %p104
      %s107 = sadd.s32 %s106, 1
      %p110 = scmp.eq.s32.totalorder %s25, 1
      %p111 = scmp.ne.s32.totalorder %s106, %s108
      %p112 = scmp.eq.s32.totalorder %s25, 0
      %p113 = por %p111, %p112
      %p114 = scmp.ne.s32.totalorder %s106, %s108
      %p115 = scmp.eq.s32.totalorder %s30, 1
      %p116 = por %p114, %p115
      %p117 = scmp.ne.s32.totalorder %s108, %s109
      %p118 = scmp.eq.s32.totalorder %s30, 0
      %p119 = por %p117, %p118
      %p120 = scmp.ne.s32.totalorder %s108, %s109
      %p121 = scmp.eq.s32.totalorder %s31, 1
      %p122 = por %p120, %p121
      %p124 = scmp.ne.s32.totalorder %s109, %s123
      %p125 = scmp.eq.s32.totalorder %s31, 0
      %p126 = por %p124, %p125
      %s128 = sadd.s32 %s127, 1
      %p131 = scmp.eq.s32.totalorder %s25, 1
      %p132 = scmp.ne.s32.totalorder %s127, %s129
      %p133 = scmp.eq.s32.totalorder %s25, 0
      %p134 = por %p132, %p133
      %p135 = scmp.ne.s32.totalorder %s127, %s129
      %p136 = scmp.eq.s32.totalorder %s30, 1
      %p137 = por %p135, %p136
      %p138 = scmp.ne.s32.totalorder %s129, %s130
      %p139 = scmp.eq.s32.totalorder %s30, 0
      %p140 = por %p138, %p139
      %p141 = scmp.ne.s32.totalorder %s129, %s130
      %p142 = scmp.eq.s32.totalorder %s31, 1
      %p143 = por %p141, %p142
      %p145 = scmp.ne.s32.totalorder %s130, %s144
      %p146 = scmp.eq.s32.totalorder %s31, 0
      %p147 = por %p145, %p146
      %s149 = sadd.s32 %s148, 1
      %p152 = scmp.eq.s32.totalorder %s25, 1
      %p153 = scmp.ne.s32.totalorder %s148, %s150
      %p154 = scmp.eq.s32.totalorder %s25, 0
      %p155 = por %p153, %p154
      %p156 = scmp.ne.s32.totalorder %s148, %s150
      %p157 = scmp.eq.s32.totalorder %s30, 1
      %p158 = por %p156, %p157
      %p159 = scmp.ne.s32.totalorder %s150, %s151
      %p160 = scmp.eq.s32.totalorder %s30, 0
      %p161 = por %p159, %p160
      %p162 = scmp.ne.s32.totalorder %s150, %s151
      %p163 = scmp.eq.s32.totalorder %s31, 1
      %p164 = por %p162, %p163
      %p166 = scmp.ne.s32.totalorder %s151, %s165
      %p167 = scmp.eq.s32.totalorder %s31, 0
      %p168 = por %p166, %p167
      %s170 = sadd.s32 %s169, 1
      %p173 = scmp.eq.s32.totalorder %s25, 1
      %p174 = scmp.ne.s32.totalorder %s169, %s171
      %p175 = scmp.eq.s32.totalorder %s25, 0
      %p176 = por %p174, %p175
      %p177 = scmp.ne.s32.totalorder %s169, %s171
      %p178 = scmp.eq.s32.totalorder %s30, 1
      %p179 = por %p177, %p178
      %p180 = scmp.ne.s32.totalorder %s171, %s172
      %p181 = scmp.eq.s32.totalorder %s30, 0
      %p182 = por %p180, %p181
      %p183 = scmp.ne.s32.totalorder %s171, %s172
      %p184 = scmp.eq.s32.totalorder %s31, 1
      %p185 = por %p183, %p184
      %p187 = scmp.ne.s32.totalorder %s172, %s186
      %p188 = scmp.eq.s32.totalorder %s31, 0
      %p189 = por %p187, %p188
      %s191 = sadd.s32 %s190, 1
      %p194 = scmp.eq.s32.totalorder %s25, 1
      %p195 = scmp.ne.s32.totalorder %s190, %s192
      %p196 = scmp.eq.s32.totalorder %s25, 0
      %p197 = por %p195, %p196
      %p198 = scmp.ne.s32.totalorder %s190, %s192
      %p199 = scmp.eq.s32.totalorder %s30, 1
      %p200 = por %p198, %p199
      %p201 = scmp.ne.s32.totalorder %s192, %s193
      %p202 = scmp.eq.s32.totalorder %s30, 0
      %p203 = por %p201, %p202
      %p204 = scmp.ne.s32.totalorder %s192, %s193
      %p205 = scmp.eq.s32.totalorder %s31, 1
      %p206 = por %p204, %p205
      %p208 = scmp.ne.s32.totalorder %s193, %s207
      %p209 = scmp.eq.s32.totalorder %s31, 0
      %p210 = por %p208, %p209
      %s211 = ssub.s32 %s25, %s32
      %p212 = scmp.eq.s32.totalorder %s211, 0
      %s214 = sadd.s32 %s213, 1
      %s215 = scalar_select %p212, %s213, %s214
      %p218 = pneg %p212
      %p219 = scmp.eq.s32.totalorder %s25, 1
      %p220 = por %p218, %p219
      %p221 = scmp.ne.s32.totalorder %s213, %s216
      %p222 = scmp.eq.s32.totalorder %s25, 0
      %p223 = por %p221, %p222
      %p224 = scmp.ne.s32.totalorder %s213, %s216
      %p225 = scmp.eq.s32.totalorder %s30, 1
      %p226 = por %p224, %p225
      %p227 = scmp.ne.s32.totalorder %s216, %s217
      %p228 = scmp.eq.s32.totalorder %s30, 0
      %p229 = por %p227, %p228
      %p230 = scmp.ne.s32.totalorder %s216, %s217
      %p231 = scmp.eq.s32.totalorder %s31, 1
      %p232 = por %p230, %p231
      %p234 = scmp.ne.s32.totalorder %s217, %s233
      %p235 = scmp.eq.s32.totalorder %s31, 0
      %p236 = por %p234, %p235
      %p237 = scmp.le.s32.totalorder 1, %s25
      %p238 = scmp.lt.s32.totalorder %s25, 3
      %p239 = pnand %p237, %p238
      %p240 = pneg %p239
      // Predicated region
      $region9: #{tpu_custom_call.1} parent=5 // pred_check
        _
      $region10: #{tpu_custom_call.1} parent=5 // pred_check_branch
        %242 = sbr.rel (%p239) target = $region12
      $region11: #{tpu_custom_call.1} parent=5 // pred_region
        %s243 = ssub.s32 %s25, 1
        // Predicated region
        $region13: #{tpu_custom_call.1} parent=11 // pred_check
          %p244 = pneg %p46
        $region14: #{tpu_custom_call.1} parent=11 // pred_check_branch
          %246 = sbr.rel (%p244) target = $region16
        $region15: #{tpu_custom_call.1} parent=11 // pred_region
          %s248 = ssub.s32 16, 16
          %249 = vsyncadd [#allocation5], %s248
          %252 = dma.hbm_to_smem %s0, 16, [#allocation2], [#allocation5]
        $region16: #{tpu_custom_call.1} parent=11 // pred_fallthru
          _
        // Predicated region
        $region17: #{tpu_custom_call.1} parent=11 // pred_check
          %p253 = pneg %p119
        $region18: #{tpu_custom_call.1} parent=11 // pred_check_branch
          %255 = sbr.rel (%p253) target = $region20
        $region19: #{tpu_custom_call.1} parent=11 // pred_region
          %s257 = ssub.s32 20480, 20480
          %258 = vsyncadd [#allocation8], %s257
          %s259 = sshll.u32 [#allocation9], 4
          %s260 = int_to_ptr.vmem [resolvable:$true] %s259
          %265 = dma.hbm_to_vmem [thread:$0]  %s3, 20480, %s260, [#allocation8], 320, 320, 20
        $region20: #{tpu_custom_call.1} parent=11 // pred_fallthru
          _
        // Predicated region
        $region21: #{tpu_custom_call.1} parent=11 // pred_check
          %p266 = pneg %p140
        $region22: #{tpu_custom_call.1} parent=11 // pred_check_branch
          %268 = sbr.rel (%p266) target = $region24
        $region23: #{tpu_custom_call.1} parent=11 // pred_region
          %s270 = ssub.s32 1280, 1280
          %271 = vsyncadd [#allocation11], %s270
          %s272 = sshll.u32 [#allocation10], 4
          %s273 = int_to_ptr.vmem [resolvable:$true] %s272
          %278 = dma.hbm_to_vmem [thread:$0]  %s4, 1280, %s273, [#allocation11], 320, 320, 20
        $region24: #{tpu_custom_call.1} parent=11 // pred_fallthru
          _
        // Predicated region
        $region25: #{tpu_custom_call.1} parent=11 // pred_check
          %p279 = pneg %p161
        $region26: #{tpu_custom_call.1} parent=11 // pred_check_branch
          %281 = sbr.rel (%p279) target = $region28
        $region27: #{tpu_custom_call.1} parent=11 // pred_region
          _
        $region28: #{tpu_custom_call.1} parent=11 // pred_fallthru
          _
        // Predicated region
        $region29: #{tpu_custom_call.1} parent=11 // pred_check
          %p282 = pneg %p182
        $region30: #{tpu_custom_call.1} parent=11 // pred_check_branch
          %284 = sbr.rel (%p282) target = $region32
        $region31: #{tpu_custom_call.1} parent=11 // pred_region
          %s286 = ssub.s32 20480, 20480
          %287 = vsyncadd [#allocation11], %s286
          %s288 = sshll.u32 [#allocation12], 4
          %s289 = int_to_ptr.vmem [resolvable:$true] %s288
          %294 = dma.hbm_to_vmem [thread:$0]  %s6, 20480, %s289, [#allocation11], 256, 256, 16
        $region32: #{tpu_custom_call.1} parent=11 // pred_fallthru
          _
        // Predicated region
        $region33: #{tpu_custom_call.1} parent=11 // pred_check
          %p295 = pneg %p203
        $region34: #{tpu_custom_call.1} parent=11 // pred_check_branch
          %297 = sbr.rel (%p295) target = $region36
        $region35: #{tpu_custom_call.1} parent=11 // pred_region
          _
        $region36: #{tpu_custom_call.1} parent=11 // pred_fallthru
          _
      $region12: #{tpu_custom_call.1} parent=5 // pred_fallthru
        _
      %p298 = scmp.lt.s32.totalorder %s25, 2
      // Predicated region
      $region37: #{tpu_custom_call.1} parent=5 // pred_check
        %p299 = pneg %p298
      $region38: #{tpu_custom_call.1} parent=5 // pred_check_branch
        %301 = sbr.rel (%p299) target = $region40
      $region39: #{tpu_custom_call.1} parent=5 // pred_region
        // Predicated region
        $region41: #{tpu_custom_call.1} parent=39 // pred_check
          %p302 = pneg %p66
        $region42: #{tpu_custom_call.1} parent=39 // pred_check_branch
          %304 = sbr.rel (%p302) target = $region44
        $region43: #{tpu_custom_call.1} parent=39 // pred_region
          %s305 = sand.u32 %s56, 1
          %s306 = scalar_lea.sflag [#allocation3], %s305
          %s307 = sand.u32 %s56, 1
          %s308 = smul.addr %s307, 32
          %s309 = scalar_lea.vmem [#allocation6], %s308
          %s311 = ssub.s32 512, 512
          %312 = vsyncadd %s306, %s311
          %s313 = smul.addr %s25, 4
          %s314 = smul.addr %s313, 128
          %s315 = scalar_lea.hbm %s1, %s314
          %s317 = sshll.u32 %s309, 4
          %s318 = int_to_ptr.vmem [resolvable:$true] %s317
          %320 = dma.hbm_to_vmem [thread:$0]  %s315, 512, %s318, %s306
        $region44: #{tpu_custom_call.1} parent=39 // pred_fallthru
          _
        // Predicated region
        $region45: #{tpu_custom_call.1} parent=39 // pred_check
          %p321 = pneg %p92
        $region46: #{tpu_custom_call.1} parent=39 // pred_check_branch
          %323 = sbr.rel (%p321) target = $region48
        $region47: #{tpu_custom_call.1} parent=39 // pred_region
          %s324 = sand.u32 %s25, 1
          %s325 = scalar_lea.sflag [#allocation8], %s324
          %s326 = sand.u32 %s82, 1
          %s327 = smul.addr %s326, 8
          %s328 = scalar_lea.vmem [#allocation7], %s327
          %s330 = ssub.s32 128, 128
          %331 = vsyncadd %s325, %s330
          %s332 = smul.addr %s25, 128
          %s333 = scalar_lea.hbm %s2, %s332
          %s335 = sshll.u32 %s328, 4
          %s336 = int_to_ptr.vmem [resolvable:$true] %s335
          %338 = dma.hbm_to_vmem [thread:$0]  %s333, 128, %s336, %s325
        $region48: #{tpu_custom_call.1} parent=39 // pred_fallthru
          _
      $region40: #{tpu_custom_call.1} parent=5 // pred_fallthru
        _
      %p339 = scmp.le.s32.totalorder 1, %s25
      %p340 = scmp.lt.s32.totalorder %s25, 3
      %p341 = pnand %p339, %p340
      %p342 = pneg %p341
      // Predicated region
      $region49: #{tpu_custom_call.1} parent=5 // pred_check
        _
      $region50: #{tpu_custom_call.1} parent=5 // pred_check_branch
        %344 = sbr.rel (%p341) target = $region52
      $region51: #{tpu_custom_call.1} parent=5 // pred_region
        %s345 = ssub.s32 %s25, 1
        // Predicated region
        $region53: #{tpu_custom_call.1} parent=51 // pred_check
          %p346 = pneg %p46
        $region54: #{tpu_custom_call.1} parent=51 // pred_check_branch
          %348 = sbr.rel (%p346) target = $region56
        $region55: #{tpu_custom_call.1} parent=51 // pred_region
          %349 = dma.done [#allocation5], 16
        $region56: #{tpu_custom_call.1} parent=51 // pred_fallthru
          _
        %s350 = sand.u32 %s59, 1
        %s351 = scalar_lea.sflag [#allocation3], %s350
        %s352 = sand.u32 %s59, 1
        %s353 = smul.addr %s352, 32
        %s354 = scalar_lea.vmem [#allocation6], %s353
        // Predicated region
        $region57: #{tpu_custom_call.1} parent=51 // pred_check
          %p355 = pneg %p72
        $region58: #{tpu_custom_call.1} parent=51 // pred_check_branch
          %357 = sbr.rel (%p355) target = $region60
        $region59: #{tpu_custom_call.1} parent=51 // pred_region
          %358 = dma.done %s351, 512
        $region60: #{tpu_custom_call.1} parent=51 // pred_fallthru
          _
        %s359 = sand.u32 %s30, 1
        %s360 = scalar_lea.sflag [#allocation8], %s359
        %s361 = sand.u32 %s85, 1
        %s362 = smul.addr %s361, 8
        %s363 = scalar_lea.vmem [#allocation7], %s362
        // Predicated region
        $region61: #{tpu_custom_call.1} parent=51 // pred_check
          %p364 = pneg %p98
        $region62: #{tpu_custom_call.1} parent=51 // pred_check_branch
          %366 = sbr.rel (%p364) target = $region64
        $region63: #{tpu_custom_call.1} parent=51 // pred_region
          %367 = dma.done %s360, 128
        $region64: #{tpu_custom_call.1} parent=51 // pred_fallthru
          _
        // Predicated region
        $region65: #{tpu_custom_call.1} parent=51 // pred_check
          %p368 = pneg %p119
        $region66: #{tpu_custom_call.1} parent=51 // pred_check_branch
          %370 = sbr.rel (%p368) target = $region68
        $region67: #{tpu_custom_call.1} parent=51 // pred_region
          %371 = dma.done [#allocation8], 20480
        $region68: #{tpu_custom_call.1} parent=51 // pred_fallthru
          _
        // Predicated region
        $region69: #{tpu_custom_call.1} parent=51 // pred_check
          %p372 = pneg %p140
        $region70: #{tpu_custom_call.1} parent=51 // pred_check_branch
          %374 = sbr.rel (%p372) target = $region72
        $region71: #{tpu_custom_call.1} parent=51 // pred_region
          %375 = dma.done [#allocation11], 1280
        $region72: #{tpu_custom_call.1} parent=51 // pred_fallthru
          _
        // Predicated region
        $region73: #{tpu_custom_call.1} parent=51 // pred_check
          %p376 = pneg %p182
        $region74: #{tpu_custom_call.1} parent=51 // pred_check_branch
          %378 = sbr.rel (%p376) target = $region76
        $region75: #{tpu_custom_call.1} parent=51 // pred_region
          %379 = dma.done [#allocation11], 20480
        $region76: #{tpu_custom_call.1} parent=51 // pred_fallthru
          _
        %380 = sfence
        %p381 = pneg %p46
        %p382 = pneg %p43
        %s383 = sand.u32 %s59, 1
        %s384 = scalar_lea.sflag [#allocation3], %s383
        %s385 = sand.u32 %s59, 1
        %s386 = smul.addr %s385, 32
        %s387 = scalar_lea.vmem [#allocation6], %s386
        %p388 = pneg %p72
        %p389 = pneg %p69
        %s390 = sand.u32 %s30, 1
        %s391 = scalar_lea.sflag [#allocation8], %s390
        %s392 = sand.u32 %s85, 1
        %s393 = smul.addr %s392, 8
        %s394 = scalar_lea.vmem [#allocation7], %s393
        %p395 = pneg %p98
        %p396 = pneg %p95
        %p397 = pneg %p119
        %p398 = pneg %p116
        %p399 = pneg %p140
        %p400 = pneg %p137
        %p401 = pneg %p161
        %p402 = pneg %p158
        %p403 = pneg %p182
        %p404 = pneg %p179
        %p405 = pneg %p203
        %p406 = pneg %p200
        %p407 = pneg %p229
        %p408 = pneg %p226
        %s409 = sand.u32 %s216, 1
        %s410 = scalar_lea.sflag [#allocation4], %s409
        %s411 = sand.u32 %s216, 1
        %s412 = smul.addr %s411, 16
        %s413 = scalar_lea.vmem [#allocation13], %s412
        %v415 = vld [vmem:[%s354] sm:$0xff]
        %v416 = vld [vmem:[%s354 + $0x8] sm:$0xff]
        %v417 = vld [vmem:[%s354 + $0x10] sm:$0xff]
        %v418 = vld [vmem:[%s354 + $0x18] sm:$0xff]
        %v419 = vpack.c.bf16 %v415, %v415
        %v420 = vpack.c.bf16 %v416, %v416
        %v421 = vpack.c.bf16 %v417, %v417
        %v422 = vpack.c.bf16 %v418, %v418
        %v423 = vld [vmem:[%s363] sm:$0xff]
        %v424 = vpack.c.bf16 %v423, %v423
        %v425 = vld [vmem:[#allocation9] sm:$0xff]
        %v426 = vld [vmem:[#allocation9 + $0x8] sm:$0xff]
        %v427 = vld [vmem:[#allocation9 + $0x10] sm:$0xf]
        %v428 = vld [vmem:[#allocation9 + $0x14] sm:$0xff]
        %v429 = vld [vmem:[#allocation9 + $0x1c] sm:$0xff]
        %v430 = vld [vmem:[#allocation9 + $0x24] sm:$0xf]
        %v431 = vld [vmem:[#allocation9 + $0x28] sm:$0xff]
        %v432 = vld [vmem:[#allocation9 + $0x30] sm:$0xff]
        %v433 = vld [vmem:[#allocation9 + $0x38] sm:$0xf]
        %v434 = vld [vmem:[#allocation9 + $0x3c] sm:$0xff]
        %v435 = vld [vmem:[#allocation9 + $0x44] sm:$0xff]
        %v436 = vld [vmem:[#allocation9 + $0x4c] sm:$0xf]
        %v437 = vld [vmem:[#allocation9 + $0x50] sm:$0xff]
        %v438 = vld [vmem:[#allocation9 + $0x58] sm:$0xff]
        %v439 = vld [vmem:[#allocation9 + $0x60] sm:$0xf]
        %v440 = vld [vmem:[#allocation9 + $0x64] sm:$0xff]
        %v441 = vld [vmem:[#allocation9 + $0x6c] sm:$0xff]
        %v442 = vld [vmem:[#allocation9 + $0x74] sm:$0xf]
        %v443 = vld [vmem:[#allocation9 + $0x78] sm:$0xff]
        %v444 = vld [vmem:[#allocation9 + $0x80] sm:$0xff]
        %v445 = vld [vmem:[#allocation9 + $0x88] sm:$0xf]
        %v446 = vld [vmem:[#allocation9 + $0x8c] sm:$0xff]
        %v447 = vld [vmem:[#allocation9 + $0x94] sm:$0xff]
        %v448 = vld [vmem:[#allocation9 + $0x9c] sm:$0xf]
        %v449 = vld [vmem:[#allocation9 + $0xa0] sm:$0xff]
        %v450 = vld [vmem:[#allocation9 + $0xa8] sm:$0xff]
        %v451 = vld [vmem:[#allocation9 + $0xb0] sm:$0xf]
        %v452 = vld [vmem:[#allocation9 + $0xb4] sm:$0xff]
        %v453 = vld [vmem:[#allocation9 + $0xbc] sm:$0xff]
        %v454 = vld [vmem:[#allocation9 + $0xc4] sm:$0xf]
        %v455 = vld [vmem:[#allocation9 + $0xc8] sm:$0xff]
        %v456 = vld [vmem:[#allocation9 + $0xd0] sm:$0xff]
        %v457 = vld [vmem:[#allocation9 + $0xd8] sm:$0xf]
        %v458 = vld [vmem:[#allocation9 + $0xdc] sm:$0xff]
        %v459 = vld [vmem:[#allocation9 + $0xe4] sm:$0xff]
        %v460 = vld [vmem:[#allocation9 + $0xec] sm:$0xf]
        %v461 = vld [vmem:[#allocation9 + $0xf0] sm:$0xff]
        %v462 = vld [vmem:[#allocation9 + $0xf8] sm:$0xff]
        %v463 = vld [vmem:[#allocation9 + $0x100] sm:$0xf]
        %v464 = vld [vmem:[#allocation9 + $0x104] sm:$0xff]
        %v465 = vld [vmem:[#allocation9 + $0x10c] sm:$0xff]
        %v466 = vld [vmem:[#allocation9 + $0x114] sm:$0xf]
        %v467 = vld [vmem:[#allocation9 + $0x118] sm:$0xff]
        %v468 = vld [vmem:[#allocation9 + $0x120] sm:$0xff]
        %v469 = vld [vmem:[#allocation9 + $0x128] sm:$0xf]
        %v470 = vld [vmem:[#allocation9 + $0x12c] sm:$0xff]
        %v471 = vld [vmem:[#allocation9 + $0x134] sm:$0xff]
        %v472 = vld [vmem:[#allocation9 + $0x13c] sm:$0xf]
        %v473 = vld [vmem:[#allocation9 + $0x140] sm:$0xff]
        %v474 = vld [vmem:[#allocation9 + $0x148] sm:$0xff]
        %v475 = vld [vmem:[#allocation9 + $0x150] sm:$0xf]
        %v476 = vld [vmem:[#allocation9 + $0x154] sm:$0xff]
        %v477 = vld [vmem:[#allocation9 + $0x15c] sm:$0xff]
        %v478 = vld [vmem:[#allocation9 + $0x164] sm:$0xf]
        %v479 = vld [vmem:[#allocation9 + $0x168] sm:$0xff]
        %v480 = vld [vmem:[#allocation9 + $0x170] sm:$0xff]
        %v481 = vld [vmem:[#allocation9 + $0x178] sm:$0xf]
        %v482 = vld [vmem:[#allocation9 + $0x17c] sm:$0xff]
        %v483 = vld [vmem:[#allocation9 + $0x184] sm:$0xff]
        %v484 = vld [vmem:[#allocation9 + $0x18c] sm:$0xf]
        %v485 = vld [vmem:[#allocation9 + $0x190] sm:$0xff]
        %v486 = vld [vmem:[#allocation9 + $0x198] sm:$0xff]
        %v487 = vld [vmem:[#allocation9 + $0x1a0] sm:$0xf]
        %v488 = vld [vmem:[#allocation9 + $0x1a4] sm:$0xff]
        %v489 = vld [vmem:[#allocation9 + $0x1ac] sm:$0xff]
        %v490 = vld [vmem:[#allocation9 + $0x1b4] sm:$0xf]
        %v491 = vld [vmem:[#allocation9 + $0x1b8] sm:$0xff]
        %v492 = vld [vmem:[#allocation9 + $0x1c0] sm:$0xff]
        %v493 = vld [vmem:[#allocation9 + $0x1c8] sm:$0xf]
        %v494 = vld [vmem:[#allocation9 + $0x1cc] sm:$0xff]
        %v495 = vld [vmem:[#allocation9 + $0x1d4] sm:$0xff]
        %v496 = vld [vmem:[#allocation9 + $0x1dc] sm:$0xf]
        %v497 = vld [vmem:[#allocation9 + $0x1e0] sm:$0xff]
        %v498 = vld [vmem:[#allocation9 + $0x1e8] sm:$0xff]
        %v499 = vld [vmem:[#allocation9 + $0x1f0] sm:$0xf]
        %v500 = vld [vmem:[#allocation9 + $0x1f4] sm:$0xff]
        %v501 = vld [vmem:[#allocation9 + $0x1fc] sm:$0xff]
        %v502 = vld [vmem:[#allocation9 + $0x204] sm:$0xf]
        %v503 = vld [vmem:[#allocation9 + $0x208] sm:$0xff]
        %v504 = vld [vmem:[#allocation9 + $0x210] sm:$0xff]
        %v505 = vld [vmem:[#allocation9 + $0x218] sm:$0xf]
        %v506 = vld [vmem:[#allocation9 + $0x21c] sm:$0xff]
        %v507 = vld [vmem:[#allocation9 + $0x224] sm:$0xff]
        %v508 = vld [vmem:[#allocation9 + $0x22c] sm:$0xf]
        %v509 = vld [vmem:[#allocation9 + $0x230] sm:$0xff]
        %v510 = vld [vmem:[#allocation9 + $0x238] sm:$0xff]
        %v511 = vld [vmem:[#allocation9 + $0x240] sm:$0xf]
        %v512 = vld [vmem:[#allocation9 + $0x244] sm:$0xff]
        %v513 = vld [vmem:[#allocation9 + $0x24c] sm:$0xff]
        %v514 = vld [vmem:[#allocation9 + $0x254] sm:$0xf]
        %v515 = vld [vmem:[#allocation9 + $0x258] sm:$0xff]
        %v516 = vld [vmem:[#allocation9 + $0x260] sm:$0xff]
        %v517 = vld [vmem:[#allocation9 + $0x268] sm:$0xf]
        %v518 = vld [vmem:[#allocation9 + $0x26c] sm:$0xff]
        %v519 = vld [vmem:[#allocation9 + $0x274] sm:$0xff]
        %v520 = vld [vmem:[#allocation9 + $0x27c] sm:$0xf]
        %v521 = vld [vmem:[#allocation9 + $0x280] sm:$0xff]
        %v522 = vld [vmem:[#allocation9 + $0x288] sm:$0xff]
        %v523 = vld [vmem:[#allocation9 + $0x290] sm:$0xf]
        %v524 = vld [vmem:[#allocation9 + $0x294] sm:$0xff]
        %v525 = vld [vmem:[#allocation9 + $0x29c] sm:$0xff]
        %v526 = vld [vmem:[#allocation9 + $0x2a4] sm:$0xf]
        %v527 = vld [vmem:[#allocation9 + $0x2a8] sm:$0xff]
        %v528 = vld [vmem:[#allocation9 + $0x2b0] sm:$0xff]
        %v529 = vld [vmem:[#allocation9 + $0x2b8] sm:$0xf]
        %v530 = vld [vmem:[#allocation9 + $0x2bc] sm:$0xff]
        %v531 = vld [vmem:[#allocation9 + $0x2c4] sm:$0xff]
        %v532 = vld [vmem:[#allocation9 + $0x2cc] sm:$0xf]
        %v533 = vld [vmem:[#allocation9 + $0x2d0] sm:$0xff]
        %v534 = vld [vmem:[#allocation9 + $0x2d8] sm:$0xff]
        %v535 = vld [vmem:[#allocation9 + $0x2e0] sm:$0xf]
        %v536 = vld [vmem:[#allocation9 + $0x2e4] sm:$0xff]
        %v537 = vld [vmem:[#allocation9 + $0x2ec] sm:$0xff]
        %v538 = vld [vmem:[#allocation9 + $0x2f4] sm:$0xf]
        %v539 = vld [vmem:[#allocation9 + $0x2f8] sm:$0xff]
        %v540 = vld [vmem:[#allocation9 + $0x300] sm:$0xff]
        %v541 = vld [vmem:[#allocation9 + $0x308] sm:$0xf]
        %v542 = vld [vmem:[#allocation9 + $0x30c] sm:$0xff]
        %v543 = vld [vmem:[#allocation9 + $0x314] sm:$0xff]
        %v544 = vld [vmem:[#allocation9 + $0x31c] sm:$0xf]
        %v545 = vld [vmem:[#allocation9 + $0x320] sm:$0xff]
        %v546 = vld [vmem:[#allocation9 + $0x328] sm:$0xff]
        %v547 = vld [vmem:[#allocation9 + $0x330] sm:$0xf]
        %v548 = vld [vmem:[#allocation9 + $0x334] sm:$0xff]
        %v549 = vld [vmem:[#allocation9 + $0x33c] sm:$0xff]
        %v550 = vld [vmem:[#allocation9 + $0x344] sm:$0xf]
        %v551 = vld [vmem:[#allocation9 + $0x348] sm:$0xff]
        %v552 = vld [vmem:[#allocation9 + $0x350] sm:$0xff]
        %v553 = vld [vmem:[#allocation9 + $0x358] sm:$0xf]
        %v554 = vld [vmem:[#allocation9 + $0x35c] sm:$0xff]
        %v555 = vld [vmem:[#allocation9 + $0x364] sm:$0xff]
        %v556 = vld [vmem:[#allocation9 + $0x36c] sm:$0xf]
        %v557 = vld [vmem:[#allocation9 + $0x370] sm:$0xff]
        %v558 = vld [vmem:[#allocation9 + $0x378] sm:$0xff]
        %v559 = vld [vmem:[#allocation9 + $0x380] sm:$0xf]
        %v560 = vld [vmem:[#allocation9 + $0x384] sm:$0xff]
        %v561 = vld [vmem:[#allocation9 + $0x38c] sm:$0xff]
        %v562 = vld [vmem:[#allocation9 + $0x394] sm:$0xf]
        %v563 = vld [vmem:[#allocation9 + $0x398] sm:$0xff]
        %v564 = vld [vmem:[#allocation9 + $0x3a0] sm:$0xff]
        %v565 = vld [vmem:[#allocation9 + $0x3a8] sm:$0xf]
        %v566 = vld [vmem:[#allocation9 + $0x3ac] sm:$0xff]
        %v567 = vld [vmem:[#allocation9 + $0x3b4] sm:$0xff]
        %v568 = vld [vmem:[#allocation9 + $0x3bc] sm:$0xf]
        %v569 = vld [vmem:[#allocation9 + $0x3c0] sm:$0xff]
        %v570 = vld [vmem:[#allocation9 + $0x3c8] sm:$0xff]
        %v571 = vld [vmem:[#allocation9 + $0x3d0] sm:$0xf]
        %v572 = vld [vmem:[#allocation9 + $0x3d4] sm:$0xff]
        %v573 = vld [vmem:[#allocation9 + $0x3dc] sm:$0xff]
        %v574 = vld [vmem:[#allocation9 + $0x3e4] sm:$0xf]
        %v575 = vld [vmem:[#allocation9 + $0x3e8] sm:$0xff]
        %v576 = vld [vmem:[#allocation9 + $0x3f0] sm:$0xff]
        %v577 = vld [vmem:[#allocation9 + $0x3f8] sm:$0xf]
        %v578 = vld [vmem:[#allocation9 + $0x3fc] sm:$0xff]
        %v579 = vld [vmem:[#allocation9 + $0x404] sm:$0xff]
        %v580 = vld [vmem:[#allocation9 + $0x40c] sm:$0xf]
        %v581 = vld [vmem:[#allocation9 + $0x410] sm:$0xff]
        %v582 = vld [vmem:[#allocation9 + $0x418] sm:$0xff]
        %v583 = vld [vmem:[#allocation9 + $0x420] sm:$0xf]
        %v584 = vld [vmem:[#allocation9 + $0x424] sm:$0xff]
        %v585 = vld [vmem:[#allocation9 + $0x42c] sm:$0xff]
        %v586 = vld [vmem:[#allocation9 + $0x434] sm:$0xf]
        %v587 = vld [vmem:[#allocation9 + $0x438] sm:$0xff]
        %v588 = vld [vmem:[#allocation9 + $0x440] sm:$0xff]
        %v589 = vld [vmem:[#allocation9 + $0x448] sm:$0xf]
        %v590 = vld [vmem:[#allocation9 + $0x44c] sm:$0xff]
        %v591 = vld [vmem:[#allocation9 + $0x454] sm:$0xff]
        %v592 = vld [vmem:[#allocation9 + $0x45c] sm:$0xf]
        %v593 = vld [vmem:[#allocation9 + $0x460] sm:$0xff]
        %v594 = vld [vmem:[#allocation9 + $0x468] sm:$0xff]
        %v595 = vld [vmem:[#allocation9 + $0x470] sm:$0xf]
        %v596 = vld [vmem:[#allocation9 + $0x474] sm:$0xff]
        %v597 = vld [vmem:[#allocation9 + $0x47c] sm:$0xff]
        %v598 = vld [vmem:[#allocation9 + $0x484] sm:$0xf]
        %v599 = vld [vmem:[#allocation9 + $0x488] sm:$0xff]
        %v600 = vld [vmem:[#allocation9 + $0x490] sm:$0xff]
        %v601 = vld [vmem:[#allocation9 + $0x498] sm:$0xf]
        %v602 = vld [vmem:[#allocation9 + $0x49c] sm:$0xff]
        %v603 = vld [vmem:[#allocation9 + $0x4a4] sm:$0xff]
        %v604 = vld [vmem:[#allocation9 + $0x4ac] sm:$0xf]
        %v605 = vld [vmem:[#allocation9 + $0x4b0] sm:$0xff]
        %v606 = vld [vmem:[#allocation9 + $0x4b8] sm:$0xff]
        %v607 = vld [vmem:[#allocation9 + $0x4c0] sm:$0xf]
        %v608 = vld [vmem:[#allocation9 + $0x4c4] sm:$0xff]
        %v609 = vld [vmem:[#allocation9 + $0x4cc] sm:$0xff]
        %v610 = vld [vmem:[#allocation9 + $0x4d4] sm:$0xf]
        %v611 = vld [vmem:[#allocation9 + $0x4d8] sm:$0xff]
        %v612 = vld [vmem:[#allocation9 + $0x4e0] sm:$0xff]
        %v613 = vld [vmem:[#allocation9 + $0x4e8] sm:$0xf]
        %v614 = vld [vmem:[#allocation9 + $0x4ec] sm:$0xff]
        %v615 = vld [vmem:[#allocation9 + $0x4f4] sm:$0xff]
        %v616 = vld [vmem:[#allocation9 + $0x4fc] sm:$0xf]
        %v617 = vld [vmem:[#allocation10] sm:$0xff]
        %v618 = vld [vmem:[#allocation10 + $0x8] sm:$0xff]
        %v619 = vld [vmem:[#allocation10 + $0x10] sm:$0xf]
        %v620 = vld [vmem:[#allocation10 + $0x14] sm:$0xff]
        %v621 = vld [vmem:[#allocation10 + $0x1c] sm:$0xff]
        %v622 = vld [vmem:[#allocation10 + $0x24] sm:$0xf]
        %v623 = vld [vmem:[#allocation10 + $0x28] sm:$0xff]
        %v624 = vld [vmem:[#allocation10 + $0x30] sm:$0xff]
        %v625 = vld [vmem:[#allocation10 + $0x38] sm:$0xf]
        %v626 = vld [vmem:[#allocation10 + $0x3c] sm:$0xff]
        %v627 = vld [vmem:[#allocation10 + $0x44] sm:$0xff]
        %v628 = vld [vmem:[#allocation10 + $0x4c] sm:$0xf]
        %v641 = vunpack.c.l.b16 %v617
        %v642 = vunpack.c.h.b16 %v617
        %v643 = vunpack.c.l.b16 %v618
        %v644 = vunpack.c.h.b16 %v618
        %v645 = vunpack.c.l.b16 %v619
        %v646 = vunpack.c.l.b16 %v620
        %v647 = vunpack.c.h.b16 %v620
        %v648 = vunpack.c.l.b16 %v621
        %v649 = vunpack.c.h.b16 %v621
        %v650 = vunpack.c.l.b16 %v622
        %v651 = vunpack.c.l.b16 %v623
        %v652 = vunpack.c.h.b16 %v623
        %v653 = vunpack.c.l.b16 %v624
        %v654 = vunpack.c.h.b16 %v624
        %v655 = vunpack.c.l.b16 %v625
        %v656 = vunpack.c.l.b16 %v626
        %v657 = vunpack.c.h.b16 %v626
        %v658 = vunpack.c.l.b16 %v627
        %v659 = vunpack.c.h.b16 %v627
        %v660 = vunpack.c.l.b16 %v628
        %v661 = vpack.c.b16 %v646, %v641
        %v662 = vpack.c.b16 %v647, %v642
        %v663 = vpack.c.b16 %v648, %v643
        %v664 = vpack.c.b16 %v649, %v644
        %v665 = vpack.c.b16 %v650, %v645
        %v666 = vpack.c.b16 %v656, %v651
        %v667 = vpack.c.b16 %v657, %v652
        %v668 = vpack.c.b16 %v658, %v653
        %v669 = vpack.c.b16 %v659, %v654
        %v670 = vpack.c.b16 %v660, %v655
        %vm681 = vcmask 261120
        %v683 = vsel %vm681, %v424, 0
        %685 = vmatprep.subr.bf16.mxu0 %v662
        %686 = vmatpush1.bf16.msra.mxu0 %v661
        %687 = vmatprep.subr.bf16.mxu0 %v667
        %688 = vmatpush1.bf16.msra.mxu0 %v666
        %689 = vmatprep.subr.bf16.mxu0 0
        %690 = vmatpush1.bf16.msra.mxu0 0
        %691 = vmatprep.subr.bf16.mxu0 0
        %692 = vmatpush1.bf16.msra.mxu0 0
        %693 = vmatprep.subr.bf16.mxu0 0
        %694 = vmatpush1.bf16.msra.mxu0 0
        %695 = vmatprep.subr.bf16.mxu0 0
        %696 = vmatpush1.bf16.msra.mxu0 0
        %697 = vmatprep.subr.bf16.mxu0 0
        %698 = vmatpush1.bf16.msra.mxu0 0
        %699 = vmatprep.subr.bf16.mxu0 0
        %700 = vmatpush1.bf16.msra.mxu0 0
        %701 = vmatprep.subr.bf16.mxu0 0
        %702 = vmatpush1.bf16.msra.mxu0 0
        %703 = vmatprep.subr.bf16.mxu0 0
        %704 = vmatpush1.bf16.msra.mxu0 0
        %705 = vmatprep.subr.bf16.mxu0 0
        %706 = vmatpush1.bf16.msra.mxu0 0
        %707 = vmatprep.subr.bf16.mxu0 0
        %708 = vmatpush1.bf16.msra.mxu0 0
        %709 = vmatprep.subr.bf16.mxu0 0
        %710 = vmatpush1.bf16.msra.mxu0 0
        %711 = vmatprep.subr.bf16.mxu0 0
        %712 = vmatpush1.bf16.msra.mxu0 0
        %713 = vmatprep.subr.bf16.mxu0 0
        %714 = vmatpush1.bf16.msra.mxu0 0
        %715 = vmatprep.subr.bf16.mxu0 0
        %716 = vmatpush1.bf16.msra.mxu0 0
        %717 = vmatprep.mubr.bf16.mxu0 0
        %718 = vmatmul.mubr.bf16.gmra.mrb[0].mxu0 %v683
        %v719 = vpop.f32.mrb[0].mxu0
        %v720 = vadd.f32 0.0, %v719
        %v721 = vpop.f32.mrb[0].mxu0
        %v722 = vadd.f32 0.0, %v721
        %v723 = vpop.f32.mrb[0].mxu0
        %v724 = vpop.f32.mrb[0].mxu0
        %725 = vdwg.mxu0
        %726 = vmatprep.subr.bf16.mxu0 %v664
        %727 = vmatpush1.bf16.msra.mxu0 %v663
        %728 = vmatprep.subr.bf16.mxu0 %v669
        %729 = vmatpush1.bf16.msra.mxu0 %v668
        %730 = vmatprep.subr.bf16.mxu0 0
        %731 = vmatpush1.bf16.msra.mxu0 0
        %732 = vmatprep.subr.bf16.mxu0 0
        %733 = vmatpush1.bf16.msra.mxu0 0
        %734 = vmatprep.subr.bf16.mxu0 0
        %735 = vmatpush1.bf16.msra.mxu0 0
        %736 = vmatprep.subr.bf16.mxu0 0
        %737 = vmatpush1.bf16.msra.mxu0 0
        %738 = vmatprep.subr.bf16.mxu0 0
        %739 = vmatpush1.bf16.msra.mxu0 0
        %740 = vmatprep.subr.bf16.mxu0 0
        %741 = vmatpush1.bf16.msra.mxu0 0
        %742 = vmatprep.subr.bf16.mxu0 0
        %743 = vmatpush1.bf16.msra.mxu0 0
        %744 = vmatprep.subr.bf16.mxu0 0
        %745 = vmatpush1.bf16.msra.mxu0 0
        %746 = vmatprep.subr.bf16.mxu0 0
        %747 = vmatpush1.bf16.msra.mxu0 0
        %748 = vmatprep.subr.bf16.mxu0 0
        %749 = vmatpush1.bf16.msra.mxu0 0
        %750 = vmatprep.subr.bf16.mxu0 0
        %751 = vmatpush1.bf16.msra.mxu0 0
        %752 = vmatprep.subr.bf16.mxu0 0
        %753 = vmatpush1.bf16.msra.mxu0 0
        %754 = vmatprep.subr.bf16.mxu0 0
        %755 = vmatpush1.bf16.msra.mxu0 0
        %756 = vmatprep.subr.bf16.mxu0 0
        %757 = vmatpush1.bf16.msra.mxu0 0
        %758 = vmatprep.mubr.bf16.mxu0 0
        %759 = vmatmul.mubr.bf16.gmra.mrb[0].mxu0 %v683
        %v760 = vpop.f32.mrb[0].mxu0
        %v761 = vadd.f32 0.0, %v760
        %v762 = vpop.f32.mrb[0].mxu0
        %v763 = vadd.f32 0.0, %v762
        %v764 = vpop.f32.mrb[0].mxu0
        %v765 = vpop.f32.mrb[0].mxu0
        %766 = vdwg.mxu0
        %767 = vmatprep.subr.bf16.mxu0 0
        %768 = vmatpush1.bf16.msra.mxu0 %v665
        %769 = vmatprep.subr.bf16.mxu0 0
        %770 = vmatpush1.bf16.msra.mxu0 %v670
        %771 = vmatprep.subr.bf16.mxu0 0
        %772 = vmatpush1.bf16.msra.mxu0 0
        %773 = vmatprep.subr.bf16.mxu0 0
        %774 = vmatpush1.bf16.msra.mxu0 0
        %775 = vmatprep.subr.bf16.mxu0 0
        %776 = vmatpush1.bf16.msra.mxu0 0
        %777 = vmatprep.subr.bf16.mxu0 0
        %778 = vmatpush1.bf16.msra.mxu0 0
        %779 = vmatprep.subr.bf16.mxu0 0
        %780 = vmatpush1.bf16.msra.mxu0 0
        %781 = vmatprep.subr.bf16.mxu0 0
        %782 = vmatpush1.bf16.msra.mxu0 0
        %783 = vmatprep.subr.bf16.mxu0 0
        %784 = vmatpush1.bf16.msra.mxu0 0
        %785 = vmatprep.subr.bf16.mxu0 0
        %786 = vmatpush1.bf16.msra.mxu0 0
        %787 = vmatprep.subr.bf16.mxu0 0
        %788 = vmatpush1.bf16.msra.mxu0 0
        %789 = vmatprep.subr.bf16.mxu0 0
        %790 = vmatpush1.bf16.msra.mxu0 0
        %791 = vmatprep.subr.bf16.mxu0 0
        %792 = vmatpush1.bf16.msra.mxu0 0
        %793 = vmatprep.subr.bf16.mxu0 0
        %794 = vmatpush1.bf16.msra.mxu0 0
        %795 = vmatprep.subr.bf16.mxu0 0
        %796 = vmatpush1.bf16.msra.mxu0 0
        %797 = vmatprep.subr.bf16.mxu0 0
        %798 = vmatpush1.bf16.msra.mxu0 0
        %799 = vmatprep.mubr.bf16.mxu0 0
        %800 = vmatmul.mubr.bf16.gmra.mrb[0].mxu0 %v683
        %v801 = vpop.f32.mrb[0].mxu0
        %v802 = vadd.f32 0.0, %v801
        %v803 = vpop.f32.mrb[0].mxu0
        %v804 = vpop.f32.mrb[0].mxu0
        %v805 = vpop.f32.mrb[0].mxu0
        %806 = vdwg.mxu0
        %v999 = vunpack.c.l.b16 %v425
        %v1000 = vunpack.c.h.b16 %v425
        %v1001 = vunpack.c.l.b16 %v426
        %v1002 = vunpack.c.h.b16 %v426
        %v1003 = vunpack.c.l.b16 %v427
        %v1004 = vunpack.c.l.b16 %v428
        %v1005 = vunpack.c.h.b16 %v428
        %v1006 = vunpack.c.l.b16 %v429
        %v1007 = vunpack.c.h.b16 %v429
        %v1008 = vunpack.c.l.b16 %v430
        %v1009 = vunpack.c.l.b16 %v431
        %v1010 = vunpack.c.h.b16 %v431
        %v1011 = vunpack.c.l.b16 %v432
        %v1012 = vunpack.c.h.b16 %v432
        %v1013 = vunpack.c.l.b16 %v433
        %v1014 = vunpack.c.l.b16 %v434
        %v1015 = vunpack.c.h.b16 %v434
        %v1016 = vunpack.c.l.b16 %v435
        %v1017 = vunpack.c.h.b16 %v435
        %v1018 = vunpack.c.l.b16 %v436
        %v1019 = vunpack.c.l.b16 %v437
        %v1020 = vunpack.c.h.b16 %v437
        %v1021 = vunpack.c.l.b16 %v438
        %v1022 = vunpack.c.h.b16 %v438
        %v1023 = vunpack.c.l.b16 %v439
        %v1024 = vunpack.c.l.b16 %v440
        %v1025 = vunpack.c.h.b16 %v440
        %v1026 = vunpack.c.l.b16 %v441
        %v1027 = vunpack.c.h.b16 %v441
        %v1028 = vunpack.c.l.b16 %v442
        %v1029 = vunpack.c.l.b16 %v443
        %v1030 = vunpack.c.h.b16 %v443
        %v1031 = vunpack.c.l.b16 %v444
        %v1032 = vunpack.c.h.b16 %v444
        %v1033 = vunpack.c.l.b16 %v445
        %v1034 = vunpack.c.l.b16 %v446
        %v1035 = vunpack.c.h.b16 %v446
        %v1036 = vunpack.c.l.b16 %v447
        %v1037 = vunpack.c.h.b16 %v447
        %v1038 = vunpack.c.l.b16 %v448
        %v1039 = vunpack.c.l.b16 %v449
        %v1040 = vunpack.c.h.b16 %v449
        %v1041 = vunpack.c.l.b16 %v450
        %v1042 = vunpack.c.h.b16 %v450
        %v1043 = vunpack.c.l.b16 %v451
        %v1044 = vunpack.c.l.b16 %v452
        %v1045 = vunpack.c.h.b16 %v452
        %v1046 = vunpack.c.l.b16 %v453
        %v1047 = vunpack.c.h.b16 %v453
        %v1048 = vunpack.c.l.b16 %v454
        %v1049 = vunpack.c.l.b16 %v455
        %v1050 = vunpack.c.h.b16 %v455
        %v1051 = vunpack.c.l.b16 %v456
        %v1052 = vunpack.c.h.b16 %v456
        %v1053 = vunpack.c.l.b16 %v457
        %v1054 = vunpack.c.l.b16 %v458
        %v1055 = vunpack.c.h.b16 %v458
        %v1056 = vunpack.c.l.b16 %v459
        %v1057 = vunpack.c.h.b16 %v459
        %v1058 = vunpack.c.l.b16 %v460
        %v1059 = vunpack.c.l.b16 %v461
        %v1060 = vunpack.c.h.b16 %v461
        %v1061 = vunpack.c.l.b16 %v462
        %v1062 = vunpack.c.h.b16 %v462
        %v1063 = vunpack.c.l.b16 %v463
        %v1064 = vunpack.c.l.b16 %v464
        %v1065 = vunpack.c.h.b16 %v464
        %v1066 = vunpack.c.l.b16 %v465
        %v1067 = vunpack.c.h.b16 %v465
        %v1068 = vunpack.c.l.b16 %v466
        %v1069 = vunpack.c.l.b16 %v467
        %v1070 = vunpack.c.h.b16 %v467
        %v1071 = vunpack.c.l.b16 %v468
        %v1072 = vunpack.c.h.b16 %v468
        %v1073 = vunpack.c.l.b16 %v469
        %v1074 = vunpack.c.l.b16 %v470
        %v1075 = vunpack.c.h.b16 %v470
        %v1076 = vunpack.c.l.b16 %v471
        %v1077 = vunpack.c.h.b16 %v471
        %v1078 = vunpack.c.l.b16 %v472
        %v1079 = vunpack.c.l.b16 %v473
        %v1080 = vunpack.c.h.b16 %v473
        %v1081 = vunpack.c.l.b16 %v474
        %v1082 = vunpack.c.h.b16 %v474
        %v1083 = vunpack.c.l.b16 %v475
        %v1084 = vunpack.c.l.b16 %v476
        %v1085 = vunpack.c.h.b16 %v476
        %v1086 = vunpack.c.l.b16 %v477
        %v1087 = vunpack.c.h.b16 %v477
        %v1088 = vunpack.c.l.b16 %v478
        %v1089 = vunpack.c.l.b16 %v479
        %v1090 = vunpack.c.h.b16 %v479
        %v1091 = vunpack.c.l.b16 %v480
        %v1092 = vunpack.c.h.b16 %v480
        %v1093 = vunpack.c.l.b16 %v481
        %v1094 = vunpack.c.l.b16 %v482
        %v1095 = vunpack.c.h.b16 %v482
        %v1096 = vunpack.c.l.b16 %v483
        %v1097 = vunpack.c.h.b16 %v483
        %v1098 = vunpack.c.l.b16 %v484
        %v1099 = vunpack.c.l.b16 %v485
        %v1100 = vunpack.c.h.b16 %v485
        %v1101 = vunpack.c.l.b16 %v486
        %v1102 = vunpack.c.h.b16 %v486
        %v1103 = vunpack.c.l.b16 %v487
        %v1104 = vunpack.c.l.b16 %v488
        %v1105 = vunpack.c.h.b16 %v488
        %v1106 = vunpack.c.l.b16 %v489
        %v1107 = vunpack.c.h.b16 %v489
        %v1108 = vunpack.c.l.b16 %v490
        %v1109 = vunpack.c.l.b16 %v491
        %v1110 = vunpack.c.h.b16 %v491
        %v1111 = vunpack.c.l.b16 %v492
        %v1112 = vunpack.c.h.b16 %v492
        %v1113 = vunpack.c.l.b16 %v493
        %v1114 = vunpack.c.l.b16 %v494
        %v1115 = vunpack.c.h.b16 %v494
        %v1116 = vunpack.c.l.b16 %v495
        %v1117 = vunpack.c.h.b16 %v495
        %v1118 = vunpack.c.l.b16 %v496
        %v1119 = vunpack.c.l.b16 %v497
        %v1120 = vunpack.c.h.b16 %v497
        %v1121 = vunpack.c.l.b16 %v498
        %v1122 = vunpack.c.h.b16 %v498
        %v1123 = vunpack.c.l.b16 %v499
        %v1124 = vunpack.c.l.b16 %v500
        %v1125 = vunpack.c.h.b16 %v500
        %v1126 = vunpack.c.l.b16 %v501
        %v1127 = vunpack.c.h.b16 %v501
        %v1128 = vunpack.c.l.b16 %v502
        %v1129 = vunpack.c.l.b16 %v503
        %v1130 = vunpack.c.h.b16 %v503
        %v1131 = vunpack.c.l.b16 %v504
        %v1132 = vunpack.c.h.b16 %v504
        %v1133 = vunpack.c.l.b16 %v505
        %v1134 = vunpack.c.l.b16 %v506
        %v1135 = vunpack.c.h.b16 %v506
        %v1136 = vunpack.c.l.b16 %v507
        %v1137 = vunpack.c.h.b16 %v507
        %v1138 = vunpack.c.l.b16 %v508
        %v1139 = vunpack.c.l.b16 %v509
        %v1140 = vunpack.c.h.b16 %v509
        %v1141 = vunpack.c.l.b16 %v510
        %v1142 = vunpack.c.h.b16 %v510
        %v1143 = vunpack.c.l.b16 %v511
        %v1144 = vunpack.c.l.b16 %v512
        %v1145 = vunpack.c.h.b16 %v512
        %v1146 = vunpack.c.l.b16 %v513
        %v1147 = vunpack.c.h.b16 %v513
        %v1148 = vunpack.c.l.b16 %v514
        %v1149 = vunpack.c.l.b16 %v515
        %v1150 = vunpack.c.h.b16 %v515
        %v1151 = vunpack.c.l.b16 %v516
        %v1152 = vunpack.c.h.b16 %v516
        %v1153 = vunpack.c.l.b16 %v517
        %v1154 = vunpack.c.l.b16 %v518
        %v1155 = vunpack.c.h.b16 %v518
        %v1156 = vunpack.c.l.b16 %v519
        %v1157 = vunpack.c.h.b16 %v519
        %v1158 = vunpack.c.l.b16 %v520
        %v1159 = vunpack.c.l.b16 %v521
        %v1160 = vunpack.c.h.b16 %v521
        %v1161 = vunpack.c.l.b16 %v522
        %v1162 = vunpack.c.h.b16 %v522
        %v1163 = vunpack.c.l.b16 %v523
        %v1164 = vunpack.c.l.b16 %v524
        %v1165 = vunpack.c.h.b16 %v524
        %v1166 = vunpack.c.l.b16 %v525
        %v1167 = vunpack.c.h.b16 %v525
        %v1168 = vunpack.c.l.b16 %v526
        %v1169 = vunpack.c.l.b16 %v527
        %v1170 = vunpack.c.h.b16 %v527
        %v1171 = vunpack.c.l.b16 %v528
        %v1172 = vunpack.c.h.b16 %v528
        %v1173 = vunpack.c.l.b16 %v529
        %v1174 = vunpack.c.l.b16 %v530
        %v1175 = vunpack.c.h.b16 %v530
        %v1176 = vunpack.c.l.b16 %v531
        %v1177 = vunpack.c.h.b16 %v531
        %v1178 = vunpack.c.l.b16 %v532
        %v1179 = vunpack.c.l.b16 %v533
        %v1180 = vunpack.c.h.b16 %v533
        %v1181 = vunpack.c.l.b16 %v534
        %v1182 = vunpack.c.h.b16 %v534
        %v1183 = vunpack.c.l.b16 %v535
        %v1184 = vunpack.c.l.b16 %v536
        %v1185 = vunpack.c.h.b16 %v536
        %v1186 = vunpack.c.l.b16 %v537
        %v1187 = vunpack.c.h.b16 %v537
        %v1188 = vunpack.c.l.b16 %v538
        %v1189 = vunpack.c.l.b16 %v539
        %v1190 = vunpack.c.h.b16 %v539
        %v1191 = vunpack.c.l.b16 %v540
        %v1192 = vunpack.c.h.b16 %v540
        %v1193 = vunpack.c.l.b16 %v541
        %v1194 = vunpack.c.l.b16 %v542
        %v1195 = vunpack.c.h.b16 %v542
        %v1196 = vunpack.c.l.b16 %v543
        %v1197 = vunpack.c.h.b16 %v543
        %v1198 = vunpack.c.l.b16 %v544
        %v1199 = vunpack.c.l.b16 %v545
        %v1200 = vunpack.c.h.b16 %v545
        %v1201 = vunpack.c.l.b16 %v546
        %v1202 = vunpack.c.h.b16 %v546
        %v1203 = vunpack.c.l.b16 %v547
        %v1204 = vunpack.c.l.b16 %v548
        %v1205 = vunpack.c.h.b16 %v548
        %v1206 = vunpack.c.l.b16 %v549
        %v1207 = vunpack.c.h.b16 %v549
        %v1208 = vunpack.c.l.b16 %v550
        %v1209 = vunpack.c.l.b16 %v551
        %v1210 = vunpack.c.h.b16 %v551
        %v1211 = vunpack.c.l.b16 %v552
        %v1212 = vunpack.c.h.b16 %v552
        %v1213 = vunpack.c.l.b16 %v553
        %v1214 = vunpack.c.l.b16 %v554
        %v1215 = vunpack.c.h.b16 %v554
        %v1216 = vunpack.c.l.b16 %v555
        %v1217 = vunpack.c.h.b16 %v555
        %v1218 = vunpack.c.l.b16 %v556
        %v1219 = vunpack.c.l.b16 %v557
        %v1220 = vunpack.c.h.b16 %v557
        %v1221 = vunpack.c.l.b16 %v558
        %v1222 = vunpack.c.h.b16 %v558
        %v1223 = vunpack.c.l.b16 %v559
        %v1224 = vunpack.c.l.b16 %v560
        %v1225 = vunpack.c.h.b16 %v560
        %v1226 = vunpack.c.l.b16 %v561
        %v1227 = vunpack.c.h.b16 %v561
        %v1228 = vunpack.c.l.b16 %v562
        %v1229 = vunpack.c.l.b16 %v563
        %v1230 = vunpack.c.h.b16 %v563
        %v1231 = vunpack.c.l.b16 %v564
        %v1232 = vunpack.c.h.b16 %v564
        %v1233 = vunpack.c.l.b16 %v565
        %v1234 = vunpack.c.l.b16 %v566
        %v1235 = vunpack.c.h.b16 %v566
        %v1236 = vunpack.c.l.b16 %v567
        %v1237 = vunpack.c.h.b16 %v567
        %v1238 = vunpack.c.l.b16 %v568
        %v1239 = vunpack.c.l.b16 %v569
        %v1240 = vunpack.c.h.b16 %v569
        %v1241 = vunpack.c.l.b16 %v570
        %v1242 = vunpack.c.h.b16 %v570
        %v1243 = vunpack.c.l.b16 %v571
        %v1244 = vunpack.c.l.b16 %v572
        %v1245 = vunpack.c.h.b16 %v572
        %v1246 = vunpack.c.l.b16 %v573
        %v1247 = vunpack.c.h.b16 %v573
        %v1248 = vunpack.c.l.b16 %v574
        %v1249 = vunpack.c.l.b16 %v575
        %v1250 = vunpack.c.h.b16 %v575
        %v1251 = vunpack.c.l.b16 %v576
        %v1252 = vunpack.c.h.b16 %v576
        %v1253 = vunpack.c.l.b16 %v577
        %v1254 = vunpack.c.l.b16 %v578
        %v1255 = vunpack.c.h.b16 %v578
        %v1256 = vunpack.c.l.b16 %v579
        %v1257 = vunpack.c.h.b16 %v579
        %v1258 = vunpack.c.l.b16 %v580
        %v1259 = vunpack.c.l.b16 %v581
        %v1260 = vunpack.c.h.b16 %v581
        %v1261 = vunpack.c.l.b16 %v582
        %v1262 = vunpack.c.h.b16 %v582
        %v1263 = vunpack.c.l.b16 %v583
        %v1264 = vunpack.c.l.b16 %v584
        %v1265 = vunpack.c.h.b16 %v584
        %v1266 = vunpack.c.l.b16 %v585
        %v1267 = vunpack.c.h.b16 %v585
        %v1268 = vunpack.c.l.b16 %v586
        %v1269 = vunpack.c.l.b16 %v587
        %v1270 = vunpack.c.h.b16 %v587
        %v1271 = vunpack.c.l.b16 %v588
        %v1272 = vunpack.c.h.b16 %v588
        %v1273 = vunpack.c.l.b16 %v589
        %v1274 = vunpack.c.l.b16 %v590
        %v1275 = vunpack.c.h.b16 %v590
        %v1276 = vunpack.c.l.b16 %v591
        %v1277 = vunpack.c.h.b16 %v591
        %v1278 = vunpack.c.l.b16 %v592
        %v1279 = vunpack.c.l.b16 %v593
        %v1280 = vunpack.c.h.b16 %v593
        %v1281 = vunpack.c.l.b16 %v594
        %v1282 = vunpack.c.h.b16 %v594
        %v1283 = vunpack.c.l.b16 %v595
        %v1284 = vunpack.c.l.b16 %v596
        %v1285 = vunpack.c.h.b16 %v596
        %v1286 = vunpack.c.l.b16 %v597
        %v1287 = vunpack.c.h.b16 %v597
        %v1288 = vunpack.c.l.b16 %v598
        %v1289 = vunpack.c.l.b16 %v599
        %v1290 = vunpack.c.h.b16 %v599
        %v1291 = vunpack.c.l.b16 %v600
        %v1292 = vunpack.c.h.b16 %v600
        %v1293 = vunpack.c.l.b16 %v601
        %v1294 = vunpack.c.l.b16 %v602
        %v1295 = vunpack.c.h.b16 %v602
        %v1296 = vunpack.c.l.b16 %v603
        %v1297 = vunpack.c.h.b16 %v603
        %v1298 = vunpack.c.l.b16 %v604
        %v1299 = vunpack.c.l.b16 %v605
        %v1300 = vunpack.c.h.b16 %v605
        %v1301 = vunpack.c.l.b16 %v606
        %v1302 = vunpack.c.h.b16 %v606
        %v1303 = vunpack.c.l.b16 %v607
        %v1304 = vunpack.c.l.b16 %v608
        %v1305 = vunpack.c.h.b16 %v608
        %v1306 = vunpack.c.l.b16 %v609
        %v1307 = vunpack.c.h.b16 %v609
        %v1308 = vunpack.c.l.b16 %v610
        %v1309 = vunpack.c.l.b16 %v611
        %v1310 = vunpack.c.h.b16 %v611
        %v1311 = vunpack.c.l.b16 %v612
        %v1312 = vunpack.c.h.b16 %v612
        %v1313 = vunpack.c.l.b16 %v613
        %v1314 = vunpack.c.l.b16 %v614
        %v1315 = vunpack.c.h.b16 %v614
        %v1316 = vunpack.c.l.b16 %v615
        %v1317 = vunpack.c.h.b16 %v615
        %v1318 = vunpack.c.l.b16 %v616
        %v1319 = vpack.c.b16 %v1004, %v999
        %v1320 = vpack.c.b16 %v1005, %v1000
        %v1321 = vpack.c.b16 %v1006, %v1001
        %v1322 = vpack.c.b16 %v1007, %v1002
        %v1323 = vpack.c.b16 %v1008, %v1003
        %v1324 = vpack.c.b16 %v1014, %v1009
        %v1325 = vpack.c.b16 %v1015, %v1010
        %v1326 = vpack.c.b16 %v1016, %v1011
        %v1327 = vpack.c.b16 %v1017, %v1012
        %v1328 = vpack.c.b16 %v1018, %v1013
        %v1329 = vpack.c.b16 %v1024, %v1019
        %v1330 = vpack.c.b16 %v1025, %v1020
        %v1331 = vpack.c.b16 %v1026, %v1021
        %v1332 = vpack.c.b16 %v1027, %v1022
        %v1333 = vpack.c.b16 %v1028, %v1023
        %v1334 = vpack.c.b16 %v1034, %v1029
        %v1335 = vpack.c.b16 %v1035, %v1030
        %v1336 = vpack.c.b16 %v1036, %v1031
        %v1337 = vpack.c.b16 %v1037, %v1032
        %v1338 = vpack.c.b16 %v1038, %v1033
        %v1339 = vpack.c.b16 %v1044, %v1039
        %v1340 = vpack.c.b16 %v1045, %v1040
        %v1341 = vpack.c.b16 %v1046, %v1041
        %v1342 = vpack.c.b16 %v1047, %v1042
        %v1343 = vpack.c.b16 %v1048, %v1043
        %v1344 = vpack.c.b16 %v1054, %v1049
        %v1345 = vpack.c.b16 %v1055, %v1050
        %v1346 = vpack.c.b16 %v1056, %v1051
        %v1347 = vpack.c.b16 %v1057, %v1052
        %v1348 = vpack.c.b16 %v1058, %v1053
        %v1349 = vpack.c.b16 %v1064, %v1059
        %v1350 = vpack.c.b16 %v1065, %v1060
        %v1351 = vpack.c.b16 %v1066, %v1061
        %v1352 = vpack.c.b16 %v1067, %v1062
        %v1353 = vpack.c.b16 %v1068, %v1063
        %v1354 = vpack.c.b16 %v1074, %v1069
        %v1355 = vpack.c.b16 %v1075, %v1070
        %v1356 = vpack.c.b16 %v1076, %v1071
        %v1357 = vpack.c.b16 %v1077, %v1072
        %v1358 = vpack.c.b16 %v1078, %v1073
        %v1359 = vpack.c.b16 %v1084, %v1079
        %v1360 = vpack.c.b16 %v1085, %v1080
        %v1361 = vpack.c.b16 %v1086, %v1081
        %v1362 = vpack.c.b16 %v1087, %v1082
        %v1363 = vpack.c.b16 %v1088, %v1083
        %v1364 = vpack.c.b16 %v1094, %v1089
        %v1365 = vpack.c.b16 %v1095, %v1090
        %v1366 = vpack.c.b16 %v1096, %v1091
        %v1367 = vpack.c.b16 %v1097, %v1092
        %v1368 = vpack.c.b16 %v1098, %v1093
        %v1369 = vpack.c.b16 %v1104, %v1099
        %v1370 = vpack.c.b16 %v1105, %v1100
        %v1371 = vpack.c.b16 %v1106, %v1101
        %v1372 = vpack.c.b16 %v1107, %v1102
        %v1373 = vpack.c.b16 %v1108, %v1103
        %v1374 = vpack.c.b16 %v1114, %v1109
        %v1375 = vpack.c.b16 %v1115, %v1110
        %v1376 = vpack.c.b16 %v1116, %v1111
        %v1377 = vpack.c.b16 %v1117, %v1112
        %v1378 = vpack.c.b16 %v1118, %v1113
        %v1379 = vpack.c.b16 %v1124, %v1119
        %v1380 = vpack.c.b16 %v1125, %v1120
        %v1381 = vpack.c.b16 %v1126, %v1121
        %v1382 = vpack.c.b16 %v1127, %v1122
        %v1383 = vpack.c.b16 %v1128, %v1123
        %v1384 = vpack.c.b16 %v1134, %v1129
        %v1385 = vpack.c.b16 %v1135, %v1130
        %v1386 = vpack.c.b16 %v1136, %v1131
        %v1387 = vpack.c.b16 %v1137, %v1132
        %v1388 = vpack.c.b16 %v1138, %v1133
        %v1389 = vpack.c.b16 %v1144, %v1139
        %v1390 = vpack.c.b16 %v1145, %v1140
        %v1391 = vpack.c.b16 %v1146, %v1141
        %v1392 = vpack.c.b16 %v1147, %v1142
        %v1393 = vpack.c.b16 %v1148, %v1143
        %v1394 = vpack.c.b16 %v1154, %v1149
        %v1395 = vpack.c.b16 %v1155, %v1150
        %v1396 = vpack.c.b16 %v1156, %v1151
        %v1397 = vpack.c.b16 %v1157, %v1152
        %v1398 = vpack.c.b16 %v1158, %v1153
        %v1399 = vpack.c.b16 %v1164, %v1159
        %v1400 = vpack.c.b16 %v1165, %v1160
        %v1401 = vpack.c.b16 %v1166, %v1161
        %v1402 = vpack.c.b16 %v1167, %v1162
        %v1403 = vpack.c.b16 %v1168, %v1163
        %v1404 = vpack.c.b16 %v1174, %v1169
        %v1405 = vpack.c.b16 %v1175, %v1170
        %v1406 = vpack.c.b16 %v1176, %v1171
        %v1407 = vpack.c.b16 %v1177, %v1172
        %v1408 = vpack.c.b16 %v1178, %v1173
        %v1409 = vpack.c.b16 %v1184, %v1179
        %v1410 = vpack.c.b16 %v1185, %v1180
        %v1411 = vpack.c.b16 %v1186, %v1181
        %v1412 = vpack.c.b16 %v1187, %v1182
        %v1413 = vpack.c.b16 %v1188, %v1183
        %v1414 = vpack.c.b16 %v1194, %v1189
        %v1415 = vpack.c.b16 %v1195, %v1190
        %v1416 = vpack.c.b16 %v1196, %v1191
        %v1417 = vpack.c.b16 %v1197, %v1192
        %v1418 = vpack.c.b16 %v1198, %v1193
        %v1419 = vpack.c.b16 %v1204, %v1199
        %v1420 = vpack.c.b16 %v1205, %v1200
        %v1421 = vpack.c.b16 %v1206, %v1201
        %v1422 = vpack.c.b16 %v1207, %v1202
        %v1423 = vpack.c.b16 %v1208, %v1203
        %v1424 = vpack.c.b16 %v1214, %v1209
        %v1425 = vpack.c.b16 %v1215, %v1210
        %v1426 = vpack.c.b16 %v1216, %v1211
        %v1427 = vpack.c.b16 %v1217, %v1212
        %v1428 = vpack.c.b16 %v1218, %v1213
        %v1429 = vpack.c.b16 %v1224, %v1219
        %v1430 = vpack.c.b16 %v1225, %v1220
        %v1431 = vpack.c.b16 %v1226, %v1221
        %v1432 = vpack.c.b16 %v1227, %v1222
        %v1433 = vpack.c.b16 %v1228, %v1223
        %v1434 = vpack.c.b16 %v1234, %v1229
        %v1435 = vpack.c.b16 %v1235, %v1230
        %v1436 = vpack.c.b16 %v1236, %v1231
        %v1437 = vpack.c.b16 %v1237, %v1232
        %v1438 = vpack.c.b16 %v1238, %v1233
        %v1439 = vpack.c.b16 %v1244, %v1239
        %v1440 = vpack.c.b16 %v1245, %v1240
        %v1441 = vpack.c.b16 %v1246, %v1241
        %v1442 = vpack.c.b16 %v1247, %v1242
        %v1443 = vpack.c.b16 %v1248, %v1243
        %v1444 = vpack.c.b16 %v1254, %v1249
        %v1445 = vpack.c.b16 %v1255, %v1250
        %v1446 = vpack.c.b16 %v1256, %v1251
        %v1447 = vpack.c.b16 %v1257, %v1252
        %v1448 = vpack.c.b16 %v1258, %v1253
        %v1449 = vpack.c.b16 %v1264, %v1259
        %v1450 = vpack.c.b16 %v1265, %v1260
        %v1451 = vpack.c.b16 %v1266, %v1261
        %v1452 = vpack.c.b16 %v1267, %v1262
        %v1453 = vpack.c.b16 %v1268, %v1263
        %v1454 = vpack.c.b16 %v1274, %v1269
        %v1455 = vpack.c.b16 %v1275, %v1270
        %v1456 = vpack.c.b16 %v1276, %v1271
        %v1457 = vpack.c.b16 %v1277, %v1272
        %v1458 = vpack.c.b16 %v1278, %v1273
        %v1459 = vpack.c.b16 %v1284, %v1279
        %v1460 = vpack.c.b16 %v1285, %v1280
        %v1461 = vpack.c.b16 %v1286, %v1281
        %v1462 = vpack.c.b16 %v1287, %v1282
        %v1463 = vpack.c.b16 %v1288, %v1283
        %v1464 = vpack.c.b16 %v1294, %v1289
        %v1465 = vpack.c.b16 %v1295, %v1290
        %v1466 = vpack.c.b16 %v1296, %v1291
        %v1467 = vpack.c.b16 %v1297, %v1292
        %v1468 = vpack.c.b16 %v1298, %v1293
        %v1469 = vpack.c.b16 %v1304, %v1299
        %v1470 = vpack.c.b16 %v1305, %v1300
        %v1471 = vpack.c.b16 %v1306, %v1301
        %v1472 = vpack.c.b16 %v1307, %v1302
        %v1473 = vpack.c.b16 %v1308, %v1303
        %v1474 = vpack.c.b16 %v1314, %v1309
        %v1475 = vpack.c.b16 %v1315, %v1310
        %v1476 = vpack.c.b16 %v1316, %v1311
        %v1477 = vpack.c.b16 %v1317, %v1312
        %v1478 = vpack.c.b16 %v1318, %v1313
        %1639 = vmatprep.subr.bf16.mxu0 %v1320
        %1640 = vmatpush1.bf16.msra.mxu0 %v1319
        %1641 = vmatprep.subr.bf16.mxu0 %v1325
        %1642 = vmatpush1.bf16.msra.mxu0 %v1324
        %1643 = vmatprep.subr.bf16.mxu0 %v1330
        %1644 = vmatpush1.bf16.msra.mxu0 %v1329
        %1645 = vmatprep.subr.bf16.mxu0 %v1335
        %1646 = vmatpush1.bf16.msra.mxu0 %v1334
        %1647 = vmatprep.subr.bf16.mxu0 %v1340
        %1648 = vmatpush1.bf16.msra.mxu0 %v1339
        %1649 = vmatprep.subr.bf16.mxu0 %v1345
        %1650 = vmatpush1.bf16.msra.mxu0 %v1344
        %1651 = vmatprep.subr.bf16.mxu0 %v1350
        %1652 = vmatpush1.bf16.msra.mxu0 %v1349
        %1653 = vmatprep.subr.bf16.mxu0 %v1355
        %1654 = vmatpush1.bf16.msra.mxu0 %v1354
        %1655 = vmatprep.subr.bf16.mxu0 %v1360
        %1656 = vmatpush1.bf16.msra.mxu0 %v1359
        %1657 = vmatprep.subr.bf16.mxu0 %v1365
        %1658 = vmatpush1.bf16.msra.mxu0 %v1364
        %1659 = vmatprep.subr.bf16.mxu0 %v1370
        %1660 = vmatpush1.bf16.msra.mxu0 %v1369
        %1661 = vmatprep.subr.bf16.mxu0 %v1375
        %1662 = vmatpush1.bf16.msra.mxu0 %v1374
        %1663 = vmatprep.subr.bf16.mxu0 %v1380
        %1664 = vmatpush1.bf16.msra.mxu0 %v1379
        %1665 = vmatprep.subr.bf16.mxu0 %v1385
        %1666 = vmatpush1.bf16.msra.mxu0 %v1384
        %1667 = vmatprep.subr.bf16.mxu0 %v1390
        %1668 = vmatpush1.bf16.msra.mxu0 %v1389
        %1669 = vmatprep.subr.bf16.mxu0 %v1395
        %1670 = vmatpush1.bf16.msra.mxu0 %v1394
        %1671 = vmatprep.mubr.bf16.mxu0 %v420
        %1672 = vmatmul.mubr.bf16.gmra.mrb[0].mxu0 %v419
        %v1673 = vpop.f32.mrb[0].mxu0
        %v1674 = vadd.f32 %v720, %v1673
        %v1675 = vpop.f32.mrb[0].mxu0
        %v1676 = vadd.f32 %v722, %v1675
        %v1677 = vpop.f32.mrb[0].mxu0
        %v1678 = vpop.f32.mrb[0].mxu0
        %1679 = vdwg.mxu0
        %1680 = vmatprep.subr.bf16.mxu0 %v1400
        %1681 = vmatpush1.bf16.msra.mxu0 %v1399
        %1682 = vmatprep.subr.bf16.mxu0 %v1405
        %1683 = vmatpush1.bf16.msra.mxu0 %v1404
        %1684 = vmatprep.subr.bf16.mxu0 %v1410
        %1685 = vmatpush1.bf16.msra.mxu0 %v1409
        %1686 = vmatprep.subr.bf16.mxu0 %v1415
        %1687 = vmatpush1.bf16.msra.mxu0 %v1414
        %1688 = vmatprep.subr.bf16.mxu0 %v1420
        %1689 = vmatpush1.bf16.msra.mxu0 %v1419
        %1690 = vmatprep.subr.bf16.mxu0 %v1425
        %1691 = vmatpush1.bf16.msra.mxu0 %v1424
        %1692 = vmatprep.subr.bf16.mxu0 %v1430
        %1693 = vmatpush1.bf16.msra.mxu0 %v1429
        %1694 = vmatprep.subr.bf16.mxu0 %v1435
        %1695 = vmatpush1.bf16.msra.mxu0 %v1434
        %1696 = vmatprep.subr.bf16.mxu0 %v1440
        %1697 = vmatpush1.bf16.msra.mxu0 %v1439
        %1698 = vmatprep.subr.bf16.mxu0 %v1445
        %1699 = vmatpush1.bf16.msra.mxu0 %v1444
        %1700 = vmatprep.subr.bf16.mxu0 %v1450
        %1701 = vmatpush1.bf16.msra.mxu0 %v1449
        %1702 = vmatprep.subr.bf16.mxu0 %v1455
        %1703 = vmatpush1.bf16.msra.mxu0 %v1454
        %1704 = vmatprep.subr.bf16.mxu0 %v1460
        %1705 = vmatpush1.bf16.msra.mxu0 %v1459
        %1706 = vmatprep.subr.bf16.mxu0 %v1465
        %1707 = vmatpush1.bf16.msra.mxu0 %v1464
        %1708 = vmatprep.subr.bf16.mxu0 %v1470
        %1709 = vmatpush1.bf16.msra.mxu0 %v1469
        %1710 = vmatprep.subr.bf16.mxu0 %v1475
        %1711 = vmatpush1.bf16.msra.mxu0 %v1474
        %1712 = vmatprep.mubr.bf16.mxu0 %v422
        %1713 = vmatmul.mubr.bf16.gmra.mrb[0].mxu0 %v421
        %v1714 = vpop.f32.mrb[0].mxu0
        %v1715 = vadd.f32 %v1674, %v1714
        %v1716 = vpop.f32.mrb[0].mxu0
        %v1717 = vadd.f32 %v1676, %v1716
        %v1718 = vpop.f32.mrb[0].mxu0
        %v1719 = vpop.f32.mrb[0].mxu0
        %1720 = vdwg.mxu0
        %1721 = vmatprep.subr.bf16.mxu0 %v1322
        %1722 = vmatpush1.bf16.msra.mxu0 %v1321
        %1723 = vmatprep.subr.bf16.mxu0 %v1327
        %1724 = vmatpush1.bf16.msra.mxu0 %v1326
        %1725 = vmatprep.subr.bf16.mxu0 %v1332
        %1726 = vmatpush1.bf16.msra.mxu0 %v1331
        %1727 = vmatprep.subr.bf16.mxu0 %v1337
        %1728 = vmatpush1.bf16.msra.mxu0 %v1336
        %1729 = vmatprep.subr.bf16.mxu0 %v1342
        %1730 = vmatpush1.bf16.msra.mxu0 %v1341
        %1731 = vmatprep.subr.bf16.mxu0 %v1347
        %1732 = vmatpush1.bf16.msra.mxu0 %v1346
        %1733 = vmatprep.subr.bf16.mxu0 %v1352
        %1734 = vmatpush1.bf16.msra.mxu0 %v1351
        %1735 = vmatprep.subr.bf16.mxu0 %v1357
        %1736 = vmatpush1.bf16.msra.mxu0 %v1356
        %1737 = vmatprep.subr.bf16.mxu0 %v1362
        %1738 = vmatpush1.bf16.msra.mxu0 %v1361
        %1739 = vmatprep.subr.bf16.mxu0 %v1367
        %1740 = vmatpush1.bf16.msra.mxu0 %v1366
        %1741 = vmatprep.subr.bf16.mxu0 %v1372
        %1742 = vmatpush1.bf16.msra.mxu0 %v1371
        %1743 = vmatprep.subr.bf16.mxu0 %v1377
        %1744 = vmatpush1.bf16.msra.mxu0 %v1376
        %1745 = vmatprep.subr.bf16.mxu0 %v1382
        %1746 = vmatpush1.bf16.msra.mxu0 %v1381
        %1747 = vmatprep.subr.bf16.mxu0 %v1387
        %1748 = vmatpush1.bf16.msra.mxu0 %v1386
        %1749 = vmatprep.subr.bf16.mxu0 %v1392
        %1750 = vmatpush1.bf16.msra.mxu0 %v1391
        %1751 = vmatprep.subr.bf16.mxu0 %v1397
        %1752 = vmatpush1.bf16.msra.mxu0 %v1396
        %1753 = vmatprep.mubr.bf16.mxu0 %v420
        %1754 = vmatmul.mubr.bf16.gmra.mrb[0].mxu0 %v419
        %v1755 = vpop.f32.mrb[0].mxu0
        %v1756 = vadd.f32 %v761, %v1755
        %v1757 = vpop.f32.mrb[0].mxu0
        %v1758 = vadd.f32 %v763, %v1757
        %v1759 = vpop.f32.mrb[0].mxu0
        %v1760 = vpop.f32.mrb[0].mxu0
        %1761 = vdwg.mxu0
        %1762 = vmatprep.subr.bf16.mxu0 %v1402
        %1763 = vmatpush1.bf16.msra.mxu0 %v1401
        %1764 = vmatprep.subr.bf16.mxu0 %v1407
        %1765 = vmatpush1.bf16.msra.mxu0 %v1406
        %1766 = vmatprep.subr.bf16.mxu0 %v1412
        %1767 = vmatpush1.bf16.msra.mxu0 %v1411
        %1768 = vmatprep.subr.bf16.mxu0 %v1417
        %1769 = vmatpush1.bf16.msra.mxu0 %v1416
        %1770 = vmatprep.subr.bf16.mxu0 %v1422
        %1771 = vmatpush1.bf16.msra.mxu0 %v1421
        %1772 = vmatprep.subr.bf16.mxu0 %v1427
        %1773 = vmatpush1.bf16.msra.mxu0 %v1426
        %1774 = vmatprep.subr.bf16.mxu0 %v1432
        %1775 = vmatpush1.bf16.msra.mxu0 %v1431
        %1776 = vmatprep.subr.bf16.mxu0 %v1437
        %1777 = vmatpush1.bf16.msra.mxu0 %v1436
        %1778 = vmatprep.subr.bf16.mxu0 %v1442
        %1779 = vmatpush1.bf16.msra.mxu0 %v1441
        %1780 = vmatprep.subr.bf16.mxu0 %v1447
        %1781 = vmatpush1.bf16.msra.mxu0 %v1446
        %1782 = vmatprep.subr.bf16.mxu0 %v1452
        %1783 = vmatpush1.bf16.msra.mxu0 %v1451
        %1784 = vmatprep.subr.bf16.mxu0 %v1457
        %1785 = vmatpush1.bf16.msra.mxu0 %v1456
        %1786 = vmatprep.subr.bf16.mxu0 %v1462
        %1787 = vmatpush1.bf16.msra.mxu0 %v1461
        %1788 = vmatprep.subr.bf16.mxu0 %v1467
        %1789 = vmatpush1.bf16.msra.mxu0 %v1466
        %1790 = vmatprep.subr.bf16.mxu0 %v1472
        %1791 = vmatpush1.bf16.msra.mxu0 %v1471
        %1792 = vmatprep.subr.bf16.mxu0 %v1477
        %1793 = vmatpush1.bf16.msra.mxu0 %v1476
        %1794 = vmatprep.mubr.bf16.mxu0 %v422
        %1795 = vmatmul.mubr.bf16.gmra.mrb[0].mxu0 %v421
        %v1796 = vpop.f32.mrb[0].mxu0
        %v1797 = vadd.f32 %v1756, %v1796
        %v1798 = vpop.f32.mrb[0].mxu0
        %v1799 = vadd.f32 %v1758, %v1798
        %v1800 = vpop.f32.mrb[0].mxu0
        %v1801 = vpop.f32.mrb[0].mxu0
        %1802 = vdwg.mxu0
        %1803 = vmatprep.subr.bf16.mxu0 0
        %1804 = vmatpush1.bf16.msra.mxu0 %v1323
        %1805 = vmatprep.subr.bf16.mxu0 0
        %1806 = vmatpush1.bf16.msra.mxu0 %v1328
        %1807 = vmatprep.subr.bf16.mxu0 0
        %1808 = vmatpush1.bf16.msra.mxu0 %v1333
        %1809 = vmatprep.subr.bf16.mxu0 0
        %1810 = vmatpush1.bf16.msra.mxu0 %v1338
        %1811 = vmatprep.subr.bf16.mxu0 0
        %1812 = vmatpush1.bf16.msra.mxu0 %v1343
        %1813 = vmatprep.subr.bf16.mxu0 0
        %1814 = vmatpush1.bf16.msra.mxu0 %v1348
        %1815 = vmatprep.subr.bf16.mxu0 0
        %1816 = vmatpush1.bf16.msra.mxu0 %v1353
        %1817 = vmatprep.subr.bf16.mxu0 0
        %1818 = vmatpush1.bf16.msra.mxu0 %v1358
        %1819 = vmatprep.subr.bf16.mxu0 0
        %1820 = vmatpush1.bf16.msra.mxu0 %v1363
        %1821 = vmatprep.subr.bf16.mxu0 0
        %1822 = vmatpush1.bf16.msra.mxu0 %v1368
        %1823 = vmatprep.subr.bf16.mxu0 0
        %1824 = vmatpush1.bf16.msra.mxu0 %v1373
        %1825 = vmatprep.subr.bf16.mxu0 0
        %1826 = vmatpush1.bf16.msra.mxu0 %v1378
        %1827 = vmatprep.subr.bf16.mxu0 0
        %1828 = vmatpush1.bf16.msra.mxu0 %v1383
        %1829 = vmatprep.subr.bf16.mxu0 0
        %1830 = vmatpush1.bf16.msra.mxu0 %v1388
        %1831 = vmatprep.subr.bf16.mxu0 0
        %1832 = vmatpush1.bf16.msra.mxu0 %v1393
        %1833 = vmatprep.subr.bf16.mxu0 0
        %1834 = vmatpush1.bf16.msra.mxu0 %v1398
        %1835 = vmatprep.mubr.bf16.mxu0 %v420
        %1836 = vmatmul.mubr.bf16.gmra.mrb[0].mxu0 %v419
        %v1837 = vpop.f32.mrb[0].mxu0
        %v1838 = vadd.f32 %v802, %v1837
        %v1839 = vpop.f32.mrb[0].mxu0
        %v1840 = vpop.f32.mrb[0].mxu0
        %v1841 = vpop.f32.mrb[0].mxu0
        %1842 = vdwg.mxu0
        %1843 = vmatprep.subr.bf16.mxu0 0
        %1844 = vmatpush1.bf16.msra.mxu0 %v1403
        %1845 = vmatprep.subr.bf16.mxu0 0
        %1846 = vmatpush1.bf16.msra.mxu0 %v1408
        %1847 = vmatprep.subr.bf16.mxu0 0
        %1848 = vmatpush1.bf16.msra.mxu0 %v1413
        %1849 = vmatprep.subr.bf16.mxu0 0
        %1850 = vmatpush1.bf16.msra.mxu0 %v1418
        %1851 = vmatprep.subr.bf16.mxu0 0
        %1852 = vmatpush1.bf16.msra.mxu0 %v1423
        %1853 = vmatprep.subr.bf16.mxu0 0
        %1854 = vmatpush1.bf16.msra.mxu0 %v1428
        %1855 = vmatprep.subr.bf16.mxu0 0
        %1856 = vmatpush1.bf16.msra.mxu0 %v1433
        %1857 = vmatprep.subr.bf16.mxu0 0
        %1858 = vmatpush1.bf16.msra.mxu0 %v1438
        %1859 = vmatprep.subr.bf16.mxu0 0
        %1860 = vmatpush1.bf16.msra.mxu0 %v1443
        %1861 = vmatprep.subr.bf16.mxu0 0
        %1862 = vmatpush1.bf16.msra.mxu0 %v1448
        %1863 = vmatprep.subr.bf16.mxu0 0
        %1864 = vmatpush1.bf16.msra.mxu0 %v1453
        %1865 = vmatprep.subr.bf16.mxu0 0
        %1866 = vmatpush1.bf16.msra.mxu0 %v1458
        %1867 = vmatprep.subr.bf16.mxu0 0
        %1868 = vmatpush1.bf16.msra.mxu0 %v1463
        %1869 = vmatprep.subr.bf16.mxu0 0
        %1870 = vmatpush1.bf16.msra.mxu0 %v1468
        %1871 = vmatprep.subr.bf16.mxu0 0
        %1872 = vmatpush1.bf16.msra.mxu0 %v1473
        %1873 = vmatprep.subr.bf16.mxu0 0
        %1874 = vmatpush1.bf16.msra.mxu0 %v1478
        %1875 = vmatprep.mubr.bf16.mxu0 %v422
        %1876 = vmatmul.mubr.bf16.gmra.mrb[0].mxu0 %v421
        %v1877 = vpop.f32.mrb[0].mxu0
        %v1878 = vadd.f32 %v1838, %v1877
        %v1879 = vpop.f32.mrb[0].mxu0
        %v1880 = vpop.f32.mrb[0].mxu0
        %v1881 = vpop.f32.mrb[0].mxu0
        %1882 = vdwg.mxu0
        %v1883 = vld [vmem:[%s5] sm:$0x1f]
        %v1885 = vlaneseq
        %v1886 = vshrl.u32 %v1885, 7
        %v1887 = vsub.s32 0, %v1886
        %v1888 = vrot.slane %v1883, %v1887
        %v1889 = vlaneseq
        %v1890 = vshrl.u32 %v1889, 7
        %v1891 = vsub.s32 1, %v1890
        %v1892 = vrot.slane %v1883, %v1891
        %v1893 = vlaneseq
        %v1894 = vshrl.u32 %v1893, 7
        %v1895 = vsub.s32 2, %v1894
        %v1896 = vrot.slane %v1883, %v1895
        %v1897 = vlaneseq
        %v1898 = vshrl.u32 %v1897, 7
        %v1899 = vsub.s32 3, %v1898
        %v1900 = vrot.slane %v1883, %v1899
        %v1901 = vlaneseq
        %v1902 = vshrl.u32 %v1901, 7
        %v1903 = vsub.s32 4, %v1902
        %v1904 = vrot.slane %v1883, %v1903
        %v1910 = vadd.f32 %v1715, %v1888
        %v1911 = vadd.f32 %v1717, %v1892
        %v1912 = vadd.f32 %v1797, %v1896
        %v1913 = vadd.f32 %v1799, %v1900
        %v1914 = vadd.f32 %v1878, %v1904
        %s1915 = sld [smem:[#allocation2]]
        %p1917 = scmp.ne.f32.partialorder %s1915, %s1915
        %s1918 = sshrl.u32 %s1915, 16
        %s1919 = sand.u32 %s1918, 1
        %s1920 = sadd.s32 32767, %s1919
        %s1921 = sadd.s32 %s1915, %s1920
        %s1922 = sand.u32 %s1921, 4294901760
        %s1923 = scalar_select %p1917, 2143289344, %s1922
        %s1925 = sshrl.u32 %s1923, 16
        %v1926 = vpack.c.bf16 %v1910, %v1910
        %v1927 = vpack.c.bf16 %v1911, %v1911
        %v1928 = vpack.c.bf16 %v1912, %v1912
        %v1929 = vpack.c.bf16 %v1913, %v1913
        %v1930 = vpack.c.bf16 %v1914, %v1914
        %vm1931 = vcmp.ge.bf16.partialorder %v1926, 0
        %vm1932 = vcmp.ge.bf16.partialorder %v1927, 0
        %vm1933 = vcmp.ge.bf16.partialorder %v1928, 0
        %vm1934 = vcmp.ge.bf16.partialorder %v1929, 0
        %vm1935 = vcmp.ge.bf16.partialorder %v1930, 0
        %s1936 = sshll.u32 %s1925, 16
        %s1937 = sor.u32 %s1925, %s1936
        %v1938 = vstv %s1937
        %v1940 = vmul.bf16 %v1938, %v1926
        %v1941 = vmul.bf16 %v1938, %v1927
        %v1942 = vmul.bf16 %v1938, %v1928
        %v1943 = vmul.bf16 %v1938, %v1929
        %v1944 = vmul.bf16 %v1938, %v1930
        %v1945 = vsel %vm1931, %v1926, %v1940
        %v1946 = vsel %vm1932, %v1927, %v1941
        %v1947 = vsel %vm1933, %v1928, %v1942
        %v1948 = vsel %vm1934, %v1929, %v1943
        %v1949 = vsel %vm1935, %v1930, %v1944
        %v1950 = vld [vmem:[#allocation12] sm:$0xff]
        %v1951 = vld [vmem:[#allocation12 + $0x8] sm:$0xff]
        %v1952 = vld [vmem:[#allocation12 + $0x10] sm:$0xff]
        %v1953 = vld [vmem:[#allocation12 + $0x18] sm:$0xff]
        %v1954 = vld [vmem:[#allocation12 + $0x20] sm:$0xff]
        %v1955 = vld [vmem:[#allocation12 + $0x28] sm:$0xff]
        %v1956 = vld [vmem:[#allocation12 + $0x30] sm:$0xff]
        %v1957 = vld [vmem:[#allocation12 + $0x38] sm:$0xff]
        %v1958 = vld [vmem:[#allocation12 + $0x40] sm:$0xff]
        %v1959 = vld [vmem:[#allocation12 + $0x48] sm:$0xff]
        %v1960 = vld [vmem:[#allocation12 + $0x50] sm:$0xff]
        %v1961 = vld [vmem:[#allocation12 + $0x58] sm:$0xff]
        %v1962 = vld [vmem:[#allocation12 + $0x60] sm:$0xff]
        %v1963 = vld [vmem:[#allocation12 + $0x68] sm:$0xff]
        %v1964 = vld [vmem:[#allocation12 + $0x70] sm:$0xff]
        %v1965 = vld [vmem:[#allocation12 + $0x78] sm:$0xff]
        %v1966 = vld [vmem:[#allocation12 + $0x80] sm:$0xff]
        %v1967 = vld [vmem:[#allocation12 + $0x88] sm:$0xff]
        %v1968 = vld [vmem:[#allocation12 + $0x90] sm:$0xff]
        %v1969 = vld [vmem:[#allocation12 + $0x98] sm:$0xff]
        %v1970 = vld [vmem:[#allocation12 + $0xa0] sm:$0xff]
        %v1971 = vld [vmem:[#allocation12 + $0xa8] sm:$0xff]
        %v1972 = vld [vmem:[#allocation12 + $0xb0] sm:$0xff]
        %v1973 = vld [vmem:[#allocation12 + $0xb8] sm:$0xff]
        %v1974 = vld [vmem:[#allocation12 + $0xc0] sm:$0xff]
        %v1975 = vld [vmem:[#allocation12 + $0xc8] sm:$0xff]
        %v1976 = vld [vmem:[#allocation12 + $0xd0] sm:$0xff]
        %v1977 = vld [vmem:[#allocation12 + $0xd8] sm:$0xff]
        %v1978 = vld [vmem:[#allocation12 + $0xe0] sm:$0xff]
        %v1979 = vld [vmem:[#allocation12 + $0xe8] sm:$0xff]
        %v1980 = vld [vmem:[#allocation12 + $0xf0] sm:$0xff]
        %v1981 = vld [vmem:[#allocation12 + $0xf8] sm:$0xff]
        %v1982 = vld [vmem:[#allocation12 + $0x100] sm:$0xff]
        %v1983 = vld [vmem:[#allocation12 + $0x108] sm:$0xff]
        %v1984 = vld [vmem:[#allocation12 + $0x110] sm:$0xff]
        %v1985 = vld [vmem:[#allocation12 + $0x118] sm:$0xff]
        %v1986 = vld [vmem:[#allocation12 + $0x120] sm:$0xff]
        %v1987 = vld [vmem:[#allocation12 + $0x128] sm:$0xff]
        %v1988 = vld [vmem:[#allocation12 + $0x130] sm:$0xff]
        %v1989 = vld [vmem:[#allocation12 + $0x138] sm:$0xff]
        %v1990 = vld [vmem:[#allocation12 + $0x140] sm:$0xff]
        %v1991 = vld [vmem:[#allocation12 + $0x148] sm:$0xff]
        %v1992 = vld [vmem:[#allocation12 + $0x150] sm:$0xff]
        %v1993 = vld [vmem:[#allocation12 + $0x158] sm:$0xff]
        %v1994 = vld [vmem:[#allocation12 + $0x160] sm:$0xff]
        %v1995 = vld [vmem:[#allocation12 + $0x168] sm:$0xff]
        %v1996 = vld [vmem:[#allocation12 + $0x170] sm:$0xff]
        %v1997 = vld [vmem:[#allocation12 + $0x178] sm:$0xff]
        %v1998 = vld [vmem:[#allocation12 + $0x180] sm:$0xff]
        %v1999 = vld [vmem:[#allocation12 + $0x188] sm:$0xff]
        %v2000 = vld [vmem:[#allocation12 + $0x190] sm:$0xff]
        %v2001 = vld [vmem:[#allocation12 + $0x198] sm:$0xff]
        %v2002 = vld [vmem:[#allocation12 + $0x1a0] sm:$0xff]
        %v2003 = vld [vmem:[#allocation12 + $0x1a8] sm:$0xff]
        %v2004 = vld [vmem:[#allocation12 + $0x1b0] sm:$0xff]
        %v2005 = vld [vmem:[#allocation12 + $0x1b8] sm:$0xff]
        %v2006 = vld [vmem:[#allocation12 + $0x1c0] sm:$0xff]
        %v2007 = vld [vmem:[#allocation12 + $0x1c8] sm:$0xff]
        %v2008 = vld [vmem:[#allocation12 + $0x1d0] sm:$0xff]
        %v2009 = vld [vmem:[#allocation12 + $0x1d8] sm:$0xff]
        %v2010 = vld [vmem:[#allocation12 + $0x1e0] sm:$0xff]
        %v2011 = vld [vmem:[#allocation12 + $0x1e8] sm:$0xff]
        %v2012 = vld [vmem:[#allocation12 + $0x1f0] sm:$0xff]
        %v2013 = vld [vmem:[#allocation12 + $0x1f8] sm:$0xff]
        %v2014 = vld [vmem:[#allocation12 + $0x200] sm:$0xff]
        %v2015 = vld [vmem:[#allocation12 + $0x208] sm:$0xff]
        %v2016 = vld [vmem:[#allocation12 + $0x210] sm:$0xff]
        %v2017 = vld [vmem:[#allocation12 + $0x218] sm:$0xff]
        %v2018 = vld [vmem:[#allocation12 + $0x220] sm:$0xff]
        %v2019 = vld [vmem:[#allocation12 + $0x228] sm:$0xff]
        %v2020 = vld [vmem:[#allocation12 + $0x230] sm:$0xff]
        %v2021 = vld [vmem:[#allocation12 + $0x238] sm:$0xff]
        %v2022 = vld [vmem:[#allocation12 + $0x240] sm:$0xff]
        %v2023 = vld [vmem:[#allocation12 + $0x248] sm:$0xff]
        %v2024 = vld [vmem:[#allocation12 + $0x250] sm:$0xff]
        %v2025 = vld [vmem:[#allocation12 + $0x258] sm:$0xff]
        %v2026 = vld [vmem:[#allocation12 + $0x260] sm:$0xff]
        %v2027 = vld [vmem:[#allocation12 + $0x268] sm:$0xff]
        %v2028 = vld [vmem:[#allocation12 + $0x270] sm:$0xff]
        %v2029 = vld [vmem:[#allocation12 + $0x278] sm:$0xff]
        %v2030 = vld [vmem:[#allocation12 + $0x280] sm:$0xff]
        %v2031 = vld [vmem:[#allocation12 + $0x288] sm:$0xff]
        %v2032 = vld [vmem:[#allocation12 + $0x290] sm:$0xff]
        %v2033 = vld [vmem:[#allocation12 + $0x298] sm:$0xff]
        %v2034 = vld [vmem:[#allocation12 + $0x2a0] sm:$0xff]
        %v2035 = vld [vmem:[#allocation12 + $0x2a8] sm:$0xff]
        %v2036 = vld [vmem:[#allocation12 + $0x2b0] sm:$0xff]
        %v2037 = vld [vmem:[#allocation12 + $0x2b8] sm:$0xff]
        %v2038 = vld [vmem:[#allocation12 + $0x2c0] sm:$0xff]
        %v2039 = vld [vmem:[#allocation12 + $0x2c8] sm:$0xff]
        %v2040 = vld [vmem:[#allocation12 + $0x2d0] sm:$0xff]
        %v2041 = vld [vmem:[#allocation12 + $0x2d8] sm:$0xff]
        %v2042 = vld [vmem:[#allocation12 + $0x2e0] sm:$0xff]
        %v2043 = vld [vmem:[#allocation12 + $0x2e8] sm:$0xff]
        %v2044 = vld [vmem:[#allocation12 + $0x2f0] sm:$0xff]
        %v2045 = vld [vmem:[#allocation12 + $0x2f8] sm:$0xff]
        %v2046 = vld [vmem:[#allocation12 + $0x300] sm:$0xff]
        %v2047 = vld [vmem:[#allocation12 + $0x308] sm:$0xff]
        %v2048 = vld [vmem:[#allocation12 + $0x310] sm:$0xff]
        %v2049 = vld [vmem:[#allocation12 + $0x318] sm:$0xff]
        %v2050 = vld [vmem:[#allocation12 + $0x320] sm:$0xff]
        %v2051 = vld [vmem:[#allocation12 + $0x328] sm:$0xff]
        %v2052 = vld [vmem:[#allocation12 + $0x330] sm:$0xff]
        %v2053 = vld [vmem:[#allocation12 + $0x338] sm:$0xff]
        %v2054 = vld [vmem:[#allocation12 + $0x340] sm:$0xff]
        %v2055 = vld [vmem:[#allocation12 + $0x348] sm:$0xff]
        %v2056 = vld [vmem:[#allocation12 + $0x350] sm:$0xff]
        %v2057 = vld [vmem:[#allocation12 + $0x358] sm:$0xff]
        %v2058 = vld [vmem:[#allocation12 + $0x360] sm:$0xff]
        %v2059 = vld [vmem:[#allocation12 + $0x368] sm:$0xff]
        %v2060 = vld [vmem:[#allocation12 + $0x370] sm:$0xff]
        %v2061 = vld [vmem:[#allocation12 + $0x378] sm:$0xff]
        %v2062 = vld [vmem:[#allocation12 + $0x380] sm:$0xff]
        %v2063 = vld [vmem:[#allocation12 + $0x388] sm:$0xff]
        %v2064 = vld [vmem:[#allocation12 + $0x390] sm:$0xff]
        %v2065 = vld [vmem:[#allocation12 + $0x398] sm:$0xff]
        %v2066 = vld [vmem:[#allocation12 + $0x3a0] sm:$0xff]
        %v2067 = vld [vmem:[#allocation12 + $0x3a8] sm:$0xff]
        %v2068 = vld [vmem:[#allocation12 + $0x3b0] sm:$0xff]
        %v2069 = vld [vmem:[#allocation12 + $0x3b8] sm:$0xff]
        %v2070 = vld [vmem:[#allocation12 + $0x3c0] sm:$0xff]
        %v2071 = vld [vmem:[#allocation12 + $0x3c8] sm:$0xff]
        %v2072 = vld [vmem:[#allocation12 + $0x3d0] sm:$0xff]
        %v2073 = vld [vmem:[#allocation12 + $0x3d8] sm:$0xff]
        %v2074 = vld [vmem:[#allocation12 + $0x3e0] sm:$0xff]
        %v2075 = vld [vmem:[#allocation12 + $0x3e8] sm:$0xff]
        %v2076 = vld [vmem:[#allocation12 + $0x3f0] sm:$0xff]
        %v2077 = vld [vmem:[#allocation12 + $0x3f8] sm:$0xff]
        %v2078 = vld [vmem:[#allocation12 + $0x400] sm:$0xff]
        %v2079 = vld [vmem:[#allocation12 + $0x408] sm:$0xff]
        %v2080 = vld [vmem:[#allocation12 + $0x410] sm:$0xff]
        %v2081 = vld [vmem:[#allocation12 + $0x418] sm:$0xff]
        %v2082 = vld [vmem:[#allocation12 + $0x420] sm:$0xff]
        %v2083 = vld [vmem:[#allocation12 + $0x428] sm:$0xff]
        %v2084 = vld [vmem:[#allocation12 + $0x430] sm:$0xff]
        %v2085 = vld [vmem:[#allocation12 + $0x438] sm:$0xff]
        %v2086 = vld [vmem:[#allocation12 + $0x440] sm:$0xff]
        %v2087 = vld [vmem:[#allocation12 + $0x448] sm:$0xff]
        %v2088 = vld [vmem:[#allocation12 + $0x450] sm:$0xff]
        %v2089 = vld [vmem:[#allocation12 + $0x458] sm:$0xff]
        %v2090 = vld [vmem:[#allocation12 + $0x460] sm:$0xff]
        %v2091 = vld [vmem:[#allocation12 + $0x468] sm:$0xff]
        %v2092 = vld [vmem:[#allocation12 + $0x470] sm:$0xff]
        %v2093 = vld [vmem:[#allocation12 + $0x478] sm:$0xff]
        %v2094 = vld [vmem:[#allocation12 + $0x480] sm:$0xff]
        %v2095 = vld [vmem:[#allocation12 + $0x488] sm:$0xff]
        %v2096 = vld [vmem:[#allocation12 + $0x490] sm:$0xff]
        %v2097 = vld [vmem:[#allocation12 + $0x498] sm:$0xff]
        %v2098 = vld [vmem:[#allocation12 + $0x4a0] sm:$0xff]
        %v2099 = vld [vmem:[#allocation12 + $0x4a8] sm:$0xff]
        %v2100 = vld [vmem:[#allocation12 + $0x4b0] sm:$0xff]
        %v2101 = vld [vmem:[#allocation12 + $0x4b8] sm:$0xff]
        %v2102 = vld [vmem:[#allocation12 + $0x4c0] sm:$0xff]
        %v2103 = vld [vmem:[#allocation12 + $0x4c8] sm:$0xff]
        %v2104 = vld [vmem:[#allocation12 + $0x4d0] sm:$0xff]
        %v2105 = vld [vmem:[#allocation12 + $0x4d8] sm:$0xff]
        %v2106 = vld [vmem:[#allocation12 + $0x4e0] sm:$0xff]
        %v2107 = vld [vmem:[#allocation12 + $0x4e8] sm:$0xff]
        %v2108 = vld [vmem:[#allocation12 + $0x4f0] sm:$0xff]
        %v2109 = vld [vmem:[#allocation12 + $0x4f8] sm:$0xff]
        %v2110 = vld [vmem:[%s7] sm:$0xf]
        %v2112 = vlaneseq
        %v2113 = vshrl.u32 %v2112, 7
        %v2114 = vsub.s32 0, %v2113
        %v2115 = vrot.slane %v2110, %v2114
        %v2116 = vlaneseq
        %v2117 = vshrl.u32 %v2116, 7
        %v2118 = vsub.s32 1, %v2117
        %v2119 = vrot.slane %v2110, %v2118
        %v2120 = vlaneseq
        %v2121 = vshrl.u32 %v2120, 7
        %v2122 = vsub.s32 2, %v2121
        %v2123 = vrot.slane %v2110, %v2122
        %v2124 = vlaneseq
        %v2125 = vshrl.u32 %v2124, 7
        %v2126 = vsub.s32 3, %v2125
        %v2127 = vrot.slane %v2110, %v2126
        %v2292 = vunpack.c.l.b16 %v1950
        %v2293 = vunpack.c.h.b16 %v1950
        %v2294 = vunpack.c.l.b16 %v1951
        %v2295 = vunpack.c.h.b16 %v1951
        %v2296 = vunpack.c.l.b16 %v1952
        %v2297 = vunpack.c.h.b16 %v1952
        %v2298 = vunpack.c.l.b16 %v1953
        %v2299 = vunpack.c.h.b16 %v1953
        %v2300 = vunpack.c.l.b16 %v1954
        %v2301 = vunpack.c.h.b16 %v1954
        %v2302 = vunpack.c.l.b16 %v1955
        %v2303 = vunpack.c.h.b16 %v1955
        %v2304 = vunpack.c.l.b16 %v1956
        %v2305 = vunpack.c.h.b16 %v1956
        %v2306 = vunpack.c.l.b16 %v1957
        %v2307 = vunpack.c.h.b16 %v1957
        %v2308 = vunpack.c.l.b16 %v1958
        %v2309 = vunpack.c.h.b16 %v1958
        %v2310 = vunpack.c.l.b16 %v1959
        %v2311 = vunpack.c.h.b16 %v1959
        %v2312 = vunpack.c.l.b16 %v1960
        %v2313 = vunpack.c.h.b16 %v1960
        %v2314 = vunpack.c.l.b16 %v1961
        %v2315 = vunpack.c.h.b16 %v1961
        %v2316 = vunpack.c.l.b16 %v1962
        %v2317 = vunpack.c.h.b16 %v1962
        %v2318 = vunpack.c.l.b16 %v1963
        %v2319 = vunpack.c.h.b16 %v1963
        %v2320 = vunpack.c.l.b16 %v1964
        %v2321 = vunpack.c.h.b16 %v1964
        %v2322 = vunpack.c.l.b16 %v1965
        %v2323 = vunpack.c.h.b16 %v1965
        %v2324 = vunpack.c.l.b16 %v1966
        %v2325 = vunpack.c.h.b16 %v1966
        %v2326 = vunpack.c.l.b16 %v1967
        %v2327 = vunpack.c.h.b16 %v1967
        %v2328 = vunpack.c.l.b16 %v1968
        %v2329 = vunpack.c.h.b16 %v1968
        %v2330 = vunpack.c.l.b16 %v1969
        %v2331 = vunpack.c.h.b16 %v1969
        %v2332 = vunpack.c.l.b16 %v1970
        %v2333 = vunpack.c.h.b16 %v1970
        %v2334 = vunpack.c.l.b16 %v1971
        %v2335 = vunpack.c.h.b16 %v1971
        %v2336 = vunpack.c.l.b16 %v1972
        %v2337 = vunpack.c.h.b16 %v1972
        %v2338 = vunpack.c.l.b16 %v1973
        %v2339 = vunpack.c.h.b16 %v1973
        %v2340 = vunpack.c.l.b16 %v1974
        %v2341 = vunpack.c.h.b16 %v1974
        %v2342 = vunpack.c.l.b16 %v1975
        %v2343 = vunpack.c.h.b16 %v1975
        %v2344 = vunpack.c.l.b16 %v1976
        %v2345 = vunpack.c.h.b16 %v1976
        %v2346 = vunpack.c.l.b16 %v1977
        %v2347 = vunpack.c.h.b16 %v1977
        %v2348 = vunpack.c.l.b16 %v1978
        %v2349 = vunpack.c.h.b16 %v1978
        %v2350 = vunpack.c.l.b16 %v1979
        %v2351 = vunpack.c.h.b16 %v1979
        %v2352 = vunpack.c.l.b16 %v1980
        %v2353 = vunpack.c.h.b16 %v1980
        %v2354 = vunpack.c.l.b16 %v1981
        %v2355 = vunpack.c.h.b16 %v1981
        %v2356 = vunpack.c.l.b16 %v1982
        %v2357 = vunpack.c.h.b16 %v1982
        %v2358 = vunpack.c.l.b16 %v1983
        %v2359 = vunpack.c.h.b16 %v1983
        %v2360 = vunpack.c.l.b16 %v1984
        %v2361 = vunpack.c.h.b16 %v1984
        %v2362 = vunpack.c.l.b16 %v1985
        %v2363 = vunpack.c.h.b16 %v1985
        %v2364 = vunpack.c.l.b16 %v1986
        %v2365 = vunpack.c.h.b16 %v1986
        %v2366 = vunpack.c.l.b16 %v1987
        %v2367 = vunpack.c.h.b16 %v1987
        %v2368 = vunpack.c.l.b16 %v1988
        %v2369 = vunpack.c.h.b16 %v1988
        %v2370 = vunpack.c.l.b16 %v1989
        %v2371 = vunpack.c.h.b16 %v1989
        %v2372 = vunpack.c.l.b16 %v1990
        %v2373 = vunpack.c.h.b16 %v1990
        %v2374 = vunpack.c.l.b16 %v1991
        %v2375 = vunpack.c.h.b16 %v1991
        %v2376 = vunpack.c.l.b16 %v1992
        %v2377 = vunpack.c.h.b16 %v1992
        %v2378 = vunpack.c.l.b16 %v1993
        %v2379 = vunpack.c.h.b16 %v1993
        %v2380 = vunpack.c.l.b16 %v1994
        %v2381 = vunpack.c.h.b16 %v1994
        %v2382 = vunpack.c.l.b16 %v1995
        %v2383 = vunpack.c.h.b16 %v1995
        %v2384 = vunpack.c.l.b16 %v1996
        %v2385 = vunpack.c.h.b16 %v1996
        %v2386 = vunpack.c.l.b16 %v1997
        %v2387 = vunpack.c.h.b16 %v1997
        %v2388 = vunpack.c.l.b16 %v1998
        %v2389 = vunpack.c.h.b16 %v1998
        %v2390 = vunpack.c.l.b16 %v1999
        %v2391 = vunpack.c.h.b16 %v1999
        %v2392 = vunpack.c.l.b16 %v2000
        %v2393 = vunpack.c.h.b16 %v2000
        %v2394 = vunpack.c.l.b16 %v2001
        %v2395 = vunpack.c.h.b16 %v2001
        %v2396 = vunpack.c.l.b16 %v2002
        %v2397 = vunpack.c.h.b16 %v2002
        %v2398 = vunpack.c.l.b16 %v2003
        %v2399 = vunpack.c.h.b16 %v2003
        %v2400 = vunpack.c.l.b16 %v2004
        %v2401 = vunpack.c.h.b16 %v2004
        %v2402 = vunpack.c.l.b16 %v2005
        %v2403 = vunpack.c.h.b16 %v2005
        %v2404 = vunpack.c.l.b16 %v2006
        %v2405 = vunpack.c.h.b16 %v2006
        %v2406 = vunpack.c.l.b16 %v2007
        %v2407 = vunpack.c.h.b16 %v2007
        %v2408 = vunpack.c.l.b16 %v2008
        %v2409 = vunpack.c.h.b16 %v2008
        %v2410 = vunpack.c.l.b16 %v2009
        %v2411 = vunpack.c.h.b16 %v2009
        %v2412 = vunpack.c.l.b16 %v2010
        %v2413 = vunpack.c.h.b16 %v2010
        %v2414 = vunpack.c.l.b16 %v2011
        %v2415 = vunpack.c.h.b16 %v2011
        %v2416 = vunpack.c.l.b16 %v2012
        %v2417 = vunpack.c.h.b16 %v2012
        %v2418 = vunpack.c.l.b16 %v2013
        %v2419 = vunpack.c.h.b16 %v2013
        %v2420 = vunpack.c.l.b16 %v2014
        %v2421 = vunpack.c.h.b16 %v2014
        %v2422 = vunpack.c.l.b16 %v2015
        %v2423 = vunpack.c.h.b16 %v2015
        %v2424 = vunpack.c.l.b16 %v2016
        %v2425 = vunpack.c.h.b16 %v2016
        %v2426 = vunpack.c.l.b16 %v2017
        %v2427 = vunpack.c.h.b16 %v2017
        %v2428 = vunpack.c.l.b16 %v2018
        %v2429 = vunpack.c.h.b16 %v2018
        %v2430 = vunpack.c.l.b16 %v2019
        %v2431 = vunpack.c.h.b16 %v2019
        %v2432 = vunpack.c.l.b16 %v2020
        %v2433 = vunpack.c.h.b16 %v2020
        %v2434 = vunpack.c.l.b16 %v2021
        %v2435 = vunpack.c.h.b16 %v2021
        %v2436 = vunpack.c.l.b16 %v2022
        %v2437 = vunpack.c.h.b16 %v2022
        %v2438 = vunpack.c.l.b16 %v2023
        %v2439 = vunpack.c.h.b16 %v2023
        %v2440 = vunpack.c.l.b16 %v2024
        %v2441 = vunpack.c.h.b16 %v2024
        %v2442 = vunpack.c.l.b16 %v2025
        %v2443 = vunpack.c.h.b16 %v2025
        %v2444 = vunpack.c.l.b16 %v2026
        %v2445 = vunpack.c.h.b16 %v2026
        %v2446 = vunpack.c.l.b16 %v2027
        %v2447 = vunpack.c.h.b16 %v2027
        %v2448 = vunpack.c.l.b16 %v2028
        %v2449 = vunpack.c.h.b16 %v2028
        %v2450 = vunpack.c.l.b16 %v2029
        %v2451 = vunpack.c.h.b16 %v2029
        %v2452 = vunpack.c.l.b16 %v2030
        %v2453 = vunpack.c.h.b16 %v2030
        %v2454 = vunpack.c.l.b16 %v2031
        %v2455 = vunpack.c.h.b16 %v2031
        %v2456 = vunpack.c.l.b16 %v2032
        %v2457 = vunpack.c.h.b16 %v2032
        %v2458 = vunpack.c.l.b16 %v2033
        %v2459 = vunpack.c.h.b16 %v2033
        %v2460 = vunpack.c.l.b16 %v2034
        %v2461 = vunpack.c.h.b16 %v2034
        %v2462 = vunpack.c.l.b16 %v2035
        %v2463 = vunpack.c.h.b16 %v2035
        %v2464 = vunpack.c.l.b16 %v2036
        %v2465 = vunpack.c.h.b16 %v2036
        %v2466 = vunpack.c.l.b16 %v2037
        %v2467 = vunpack.c.h.b16 %v2037
        %v2468 = vunpack.c.l.b16 %v2038
        %v2469 = vunpack.c.h.b16 %v2038
        %v2470 = vunpack.c.l.b16 %v2039
        %v2471 = vunpack.c.h.b16 %v2039
        %v2472 = vunpack.c.l.b16 %v2040
        %v2473 = vunpack.c.h.b16 %v2040
        %v2474 = vunpack.c.l.b16 %v2041
        %v2475 = vunpack.c.h.b16 %v2041
        %v2476 = vunpack.c.l.b16 %v2042
        %v2477 = vunpack.c.h.b16 %v2042
        %v2478 = vunpack.c.l.b16 %v2043
        %v2479 = vunpack.c.h.b16 %v2043
        %v2480 = vunpack.c.l.b16 %v2044
        %v2481 = vunpack.c.h.b16 %v2044
        %v2482 = vunpack.c.l.b16 %v2045
        %v2483 = vunpack.c.h.b16 %v2045
        %v2484 = vunpack.c.l.b16 %v2046
        %v2485 = vunpack.c.h.b16 %v2046
        %v2486 = vunpack.c.l.b16 %v2047
        %v2487 = vunpack.c.h.b16 %v2047
        %v2488 = vunpack.c.l.b16 %v2048
        %v2489 = vunpack.c.h.b16 %v2048
        %v2490 = vunpack.c.l.b16 %v2049
        %v2491 = vunpack.c.h.b16 %v2049
        %v2492 = vunpack.c.l.b16 %v2050
        %v2493 = vunpack.c.h.b16 %v2050
        %v2494 = vunpack.c.l.b16 %v2051
        %v2495 = vunpack.c.h.b16 %v2051
        %v2496 = vunpack.c.l.b16 %v2052
        %v2497 = vunpack.c.h.b16 %v2052
        %v2498 = vunpack.c.l.b16 %v2053
        %v2499 = vunpack.c.h.b16 %v2053
        %v2500 = vunpack.c.l.b16 %v2054
        %v2501 = vunpack.c.h.b16 %v2054
        %v2502 = vunpack.c.l.b16 %v2055
        %v2503 = vunpack.c.h.b16 %v2055
        %v2504 = vunpack.c.l.b16 %v2056
        %v2505 = vunpack.c.h.b16 %v2056
        %v2506 = vunpack.c.l.b16 %v2057
        %v2507 = vunpack.c.h.b16 %v2057
        %v2508 = vunpack.c.l.b16 %v2058
        %v2509 = vunpack.c.h.b16 %v2058
        %v2510 = vunpack.c.l.b16 %v2059
        %v2511 = vunpack.c.h.b16 %v2059
        %v2512 = vunpack.c.l.b16 %v2060
        %v2513 = vunpack.c.h.b16 %v2060
        %v2514 = vunpack.c.l.b16 %v2061
        %v2515 = vunpack.c.h.b16 %v2061
        %v2516 = vunpack.c.l.b16 %v2062
        %v2517 = vunpack.c.h.b16 %v2062
        %v2518 = vunpack.c.l.b16 %v2063
        %v2519 = vunpack.c.h.b16 %v2063
        %v2520 = vunpack.c.l.b16 %v2064
        %v2521 = vunpack.c.h.b16 %v2064
        %v2522 = vunpack.c.l.b16 %v2065
        %v2523 = vunpack.c.h.b16 %v2065
        %v2524 = vunpack.c.l.b16 %v2066
        %v2525 = vunpack.c.h.b16 %v2066
        %v2526 = vunpack.c.l.b16 %v2067
        %v2527 = vunpack.c.h.b16 %v2067
        %v2528 = vunpack.c.l.b16 %v2068
        %v2529 = vunpack.c.h.b16 %v2068
        %v2530 = vunpack.c.l.b16 %v2069
        %v2531 = vunpack.c.h.b16 %v2069
        %v2532 = vunpack.c.l.b16 %v2070
        %v2533 = vunpack.c.h.b16 %v2070
        %v2534 = vunpack.c.l.b16 %v2071
        %v2535 = vunpack.c.h.b16 %v2071
        %v2536 = vunpack.c.l.b16 %v2072
        %v2537 = vunpack.c.h.b16 %v2072
        %v2538 = vunpack.c.l.b16 %v2073
        %v2539 = vunpack.c.h.b16 %v2073
        %v2540 = vunpack.c.l.b16 %v2074
        %v2541 = vunpack.c.h.b16 %v2074
        %v2542 = vunpack.c.l.b16 %v2075
        %v2543 = vunpack.c.h.b16 %v2075
        %v2544 = vunpack.c.l.b16 %v2076
        %v2545 = vunpack.c.h.b16 %v2076
        %v2546 = vunpack.c.l.b16 %v2077
        %v2547 = vunpack.c.h.b16 %v2077
        %v2548 = vunpack.c.l.b16 %v2078
        %v2549 = vunpack.c.h.b16 %v2078
        %v2550 = vunpack.c.l.b16 %v2079
        %v2551 = vunpack.c.h.b16 %v2079
        %v2552 = vunpack.c.l.b16 %v2080
        %v2553 = vunpack.c.h.b16 %v2080
        %v2554 = vunpack.c.l.b16 %v2081
        %v2555 = vunpack.c.h.b16 %v2081
        %v2556 = vunpack.c.l.b16 %v2082
        %v2557 = vunpack.c.h.b16 %v2082
        %v2558 = vunpack.c.l.b16 %v2083
        %v2559 = vunpack.c.h.b16 %v2083
        %v2560 = vunpack.c.l.b16 %v2084
        %v2561 = vunpack.c.h.b16 %v2084
        %v2562 = vunpack.c.l.b16 %v2085
        %v2563 = vunpack.c.h.b16 %v2085
        %v2564 = vunpack.c.l.b16 %v2086
        %v2565 = vunpack.c.h.b16 %v2086
        %v2566 = vunpack.c.l.b16 %v2087
        %v2567 = vunpack.c.h.b16 %v2087
        %v2568 = vunpack.c.l.b16 %v2088
        %v2569 = vunpack.c.h.b16 %v2088
        %v2570 = vunpack.c.l.b16 %v2089
        %v2571 = vunpack.c.h.b16 %v2089
        %v2572 = vunpack.c.l.b16 %v2090
        %v2573 = vunpack.c.h.b16 %v2090
        %v2574 = vunpack.c.l.b16 %v2091
        %v2575 = vunpack.c.h.b16 %v2091
        %v2576 = vunpack.c.l.b16 %v2092
        %v2577 = vunpack.c.h.b16 %v2092
        %v2578 = vunpack.c.l.b16 %v2093
        %v2579 = vunpack.c.h.b16 %v2093
        %v2580 = vunpack.c.l.b16 %v2094
        %v2581 = vunpack.c.h.b16 %v2094
        %v2582 = vunpack.c.l.b16 %v2095
        %v2583 = vunpack.c.h.b16 %v2095
        %v2584 = vunpack.c.l.b16 %v2096
        %v2585 = vunpack.c.h.b16 %v2096
        %v2586 = vunpack.c.l.b16 %v2097
        %v2587 = vunpack.c.h.b16 %v2097
        %v2588 = vunpack.c.l.b16 %v2098
        %v2589 = vunpack.c.h.b16 %v2098
        %v2590 = vunpack.c.l.b16 %v2099
        %v2591 = vunpack.c.h.b16 %v2099
        %v2592 = vunpack.c.l.b16 %v2100
        %v2593 = vunpack.c.h.b16 %v2100
        %v2594 = vunpack.c.l.b16 %v2101
        %v2595 = vunpack.c.h.b16 %v2101
        %v2596 = vunpack.c.l.b16 %v2102
        %v2597 = vunpack.c.h.b16 %v2102
        %v2598 = vunpack.c.l.b16 %v2103
        %v2599 = vunpack.c.h.b16 %v2103
        %v2600 = vunpack.c.l.b16 %v2104
        %v2601 = vunpack.c.h.b16 %v2104
        %v2602 = vunpack.c.l.b16 %v2105
        %v2603 = vunpack.c.h.b16 %v2105
        %v2604 = vunpack.c.l.b16 %v2106
        %v2605 = vunpack.c.h.b16 %v2106
        %v2606 = vunpack.c.l.b16 %v2107
        %v2607 = vunpack.c.h.b16 %v2107
        %v2608 = vunpack.c.l.b16 %v2108
        %v2609 = vunpack.c.h.b16 %v2108
        %v2610 = vunpack.c.l.b16 %v2109
        %v2611 = vunpack.c.h.b16 %v2109
        %v2612 = vpack.c.b16 %v2296, %v2292
        %v2613 = vpack.c.b16 %v2297, %v2293
        %v2614 = vpack.c.b16 %v2298, %v2294
        %v2615 = vpack.c.b16 %v2299, %v2295
        %v2616 = vpack.c.b16 %v2304, %v2300
        %v2617 = vpack.c.b16 %v2305, %v2301
        %v2618 = vpack.c.b16 %v2306, %v2302
        %v2619 = vpack.c.b16 %v2307, %v2303
        %v2620 = vpack.c.b16 %v2312, %v2308
        %v2621 = vpack.c.b16 %v2313, %v2309
        %v2622 = vpack.c.b16 %v2314, %v2310
        %v2623 = vpack.c.b16 %v2315, %v2311
        %v2624 = vpack.c.b16 %v2320, %v2316
        %v2625 = vpack.c.b16 %v2321, %v2317
        %v2626 = vpack.c.b16 %v2322, %v2318
        %v2627 = vpack.c.b16 %v2323, %v2319
        %v2628 = vpack.c.b16 %v2328, %v2324
        %v2629 = vpack.c.b16 %v2329, %v2325
        %v2630 = vpack.c.b16 %v2330, %v2326
        %v2631 = vpack.c.b16 %v2331, %v2327
        %v2632 = vpack.c.b16 %v2336, %v2332
        %v2633 = vpack.c.b16 %v2337, %v2333
        %v2634 = vpack.c.b16 %v2338, %v2334
        %v2635 = vpack.c.b16 %v2339, %v2335
        %v2636 = vpack.c.b16 %v2344, %v2340
        %v2637 = vpack.c.b16 %v2345, %v2341
        %v2638 = vpack.c.b16 %v2346, %v2342
        %v2639 = vpack.c.b16 %v2347, %v2343
        %v2640 = vpack.c.b16 %v2352, %v2348
        %v2641 = vpack.c.b16 %v2353, %v2349
        %v2642 = vpack.c.b16 %v2354, %v2350
        %v2643 = vpack.c.b16 %v2355, %v2351
        %v2644 = vpack.c.b16 %v2360, %v2356
        %v2645 = vpack.c.b16 %v2361, %v2357
        %v2646 = vpack.c.b16 %v2362, %v2358
        %v2647 = vpack.c.b16 %v2363, %v2359
        %v2648 = vpack.c.b16 %v2368, %v2364
        %v2649 = vpack.c.b16 %v2369, %v2365
        %v2650 = vpack.c.b16 %v2370, %v2366
        %v2651 = vpack.c.b16 %v2371, %v2367
        %v2652 = vpack.c.b16 %v2376, %v2372
        %v2653 = vpack.c.b16 %v2377, %v2373
        %v2654 = vpack.c.b16 %v2378, %v2374
        %v2655 = vpack.c.b16 %v2379, %v2375
        %v2656 = vpack.c.b16 %v2384, %v2380
        %v2657 = vpack.c.b16 %v2385, %v2381
        %v2658 = vpack.c.b16 %v2386, %v2382
        %v2659 = vpack.c.b16 %v2387, %v2383
        %v2660 = vpack.c.b16 %v2392, %v2388
        %v2661 = vpack.c.b16 %v2393, %v2389
        %v2662 = vpack.c.b16 %v2394, %v2390
        %v2663 = vpack.c.b16 %v2395, %v2391
        %v2664 = vpack.c.b16 %v2400, %v2396
        %v2665 = vpack.c.b16 %v2401, %v2397
        %v2666 = vpack.c.b16 %v2402, %v2398
        %v2667 = vpack.c.b16 %v2403, %v2399
        %v2668 = vpack.c.b16 %v2408, %v2404
        %v2669 = vpack.c.b16 %v2409, %v2405
        %v2670 = vpack.c.b16 %v2410, %v2406
        %v2671 = vpack.c.b16 %v2411, %v2407
        %v2672 = vpack.c.b16 %v2416, %v2412
        %v2673 = vpack.c.b16 %v2417, %v2413
        %v2674 = vpack.c.b16 %v2418, %v2414
        %v2675 = vpack.c.b16 %v2419, %v2415
        %v2676 = vpack.c.b16 %v2424, %v2420
        %v2677 = vpack.c.b16 %v2425, %v2421
        %v2678 = vpack.c.b16 %v2426, %v2422
        %v2679 = vpack.c.b16 %v2427, %v2423
        %v2680 = vpack.c.b16 %v2432, %v2428
        %v2681 = vpack.c.b16 %v2433, %v2429
        %v2682 = vpack.c.b16 %v2434, %v2430
        %v2683 = vpack.c.b16 %v2435, %v2431
        %v2684 = vpack.c.b16 %v2440, %v2436
        %v2685 = vpack.c.b16 %v2441, %v2437
        %v2686 = vpack.c.b16 %v2442, %v2438
        %v2687 = vpack.c.b16 %v2443, %v2439
        %v2688 = vpack.c.b16 %v2448, %v2444
        %v2689 = vpack.c.b16 %v2449, %v2445
        %v2690 = vpack.c.b16 %v2450, %v2446
        %v2691 = vpack.c.b16 %v2451, %v2447
        %v2692 = vpack.c.b16 %v2456, %v2452
        %v2693 = vpack.c.b16 %v2457, %v2453
        %v2694 = vpack.c.b16 %v2458, %v2454
        %v2695 = vpack.c.b16 %v2459, %v2455
        %v2696 = vpack.c.b16 %v2464, %v2460
        %v2697 = vpack.c.b16 %v2465, %v2461
        %v2698 = vpack.c.b16 %v2466, %v2462
        %v2699 = vpack.c.b16 %v2467, %v2463
        %v2700 = vpack.c.b16 %v2472, %v2468
        %v2701 = vpack.c.b16 %v2473, %v2469
        %v2702 = vpack.c.b16 %v2474, %v2470
        %v2703 = vpack.c.b16 %v2475, %v2471
        %v2704 = vpack.c.b16 %v2480, %v2476
        %v2705 = vpack.c.b16 %v2481, %v2477
        %v2706 = vpack.c.b16 %v2482, %v2478
        %v2707 = vpack.c.b16 %v2483, %v2479
        %v2708 = vpack.c.b16 %v2488, %v2484
        %v2709 = vpack.c.b16 %v2489, %v2485
        %v2710 = vpack.c.b16 %v2490, %v2486
        %v2711 = vpack.c.b16 %v2491, %v2487
        %v2712 = vpack.c.b16 %v2496, %v2492
        %v2713 = vpack.c.b16 %v2497, %v2493
        %v2714 = vpack.c.b16 %v2498, %v2494
        %v2715 = vpack.c.b16 %v2499, %v2495
        %v2716 = vpack.c.b16 %v2504, %v2500
        %v2717 = vpack.c.b16 %v2505, %v2501
        %v2718 = vpack.c.b16 %v2506, %v2502
        %v2719 = vpack.c.b16 %v2507, %v2503
        %v2720 = vpack.c.b16 %v2512, %v2508
        %v2721 = vpack.c.b16 %v2513, %v2509
        %v2722 = vpack.c.b16 %v2514, %v2510
        %v2723 = vpack.c.b16 %v2515, %v2511
        %v2724 = vpack.c.b16 %v2520, %v2516
        %v2725 = vpack.c.b16 %v2521, %v2517
        %v2726 = vpack.c.b16 %v2522, %v2518
        %v2727 = vpack.c.b16 %v2523, %v2519
        %v2728 = vpack.c.b16 %v2528, %v2524
        %v2729 = vpack.c.b16 %v2529, %v2525
        %v2730 = vpack.c.b16 %v2530, %v2526
        %v2731 = vpack.c.b16 %v2531, %v2527
        %v2732 = vpack.c.b16 %v2536, %v2532
        %v2733 = vpack.c.b16 %v2537, %v2533
        %v2734 = vpack.c.b16 %v2538, %v2534
        %v2735 = vpack.c.b16 %v2539, %v2535
        %v2736 = vpack.c.b16 %v2544, %v2540
        %v2737 = vpack.c.b16 %v2545, %v2541
        %v2738 = vpack.c.b16 %v2546, %v2542
        %v2739 = vpack.c.b16 %v2547, %v2543
        %v2740 = vpack.c.b16 %v2552, %v2548
        %v2741 = vpack.c.b16 %v2553, %v2549
        %v2742 = vpack.c.b16 %v2554, %v2550
        %v2743 = vpack.c.b16 %v2555, %v2551
        %v2744 = vpack.c.b16 %v2560, %v2556
        %v2745 = vpack.c.b16 %v2561, %v2557
        %v2746 = vpack.c.b16 %v2562, %v2558
        %v2747 = vpack.c.b16 %v2563, %v2559
        %v2748 = vpack.c.b16 %v2568, %v2564
        %v2749 = vpack.c.b16 %v2569, %v2565
        %v2750 = vpack.c.b16 %v2570, %v2566
        %v2751 = vpack.c.b16 %v2571, %v2567
        %v2752 = vpack.c.b16 %v2576, %v2572
        %v2753 = vpack.c.b16 %v2577, %v2573
        %v2754 = vpack.c.b16 %v2578, %v2574
        %v2755 = vpack.c.b16 %v2579, %v2575
        %v2756 = vpack.c.b16 %v2584, %v2580
        %v2757 = vpack.c.b16 %v2585, %v2581
        %v2758 = vpack.c.b16 %v2586, %v2582
        %v2759 = vpack.c.b16 %v2587, %v2583
        %v2760 = vpack.c.b16 %v2592, %v2588
        %v2761 = vpack.c.b16 %v2593, %v2589
        %v2762 = vpack.c.b16 %v2594, %v2590
        %v2763 = vpack.c.b16 %v2595, %v2591
        %v2764 = vpack.c.b16 %v2600, %v2596
        %v2765 = vpack.c.b16 %v2601, %v2597
        %v2766 = vpack.c.b16 %v2602, %v2598
        %v2767 = vpack.c.b16 %v2603, %v2599
        %v2768 = vpack.c.b16 %v2608, %v2604
        %v2769 = vpack.c.b16 %v2609, %v2605
        %v2770 = vpack.c.b16 %v2610, %v2606
        %v2771 = vpack.c.b16 %v2611, %v2607
        %2932 = vmatprep.subr.bf16.mxu0 %v2613
        %2933 = vmatpush1.bf16.msra.mxu0 %v2612
        %2934 = vmatprep.subr.bf16.mxu0 %v2617
        %2935 = vmatpush1.bf16.msra.mxu0 %v2616
        %2936 = vmatprep.subr.bf16.mxu0 %v2621
        %2937 = vmatpush1.bf16.msra.mxu0 %v2620
        %2938 = vmatprep.subr.bf16.mxu0 %v2625
        %2939 = vmatpush1.bf16.msra.mxu0 %v2624
        %2940 = vmatprep.subr.bf16.mxu0 %v2629
        %2941 = vmatpush1.bf16.msra.mxu0 %v2628
        %2942 = vmatprep.subr.bf16.mxu0 %v2633
        %2943 = vmatpush1.bf16.msra.mxu0 %v2632
        %2944 = vmatprep.subr.bf16.mxu0 %v2637
        %2945 = vmatpush1.bf16.msra.mxu0 %v2636
        %2946 = vmatprep.subr.bf16.mxu0 %v2641
        %2947 = vmatpush1.bf16.msra.mxu0 %v2640
        %2948 = vmatprep.subr.bf16.mxu0 %v2645
        %2949 = vmatpush1.bf16.msra.mxu0 %v2644
        %2950 = vmatprep.subr.bf16.mxu0 %v2649
        %2951 = vmatpush1.bf16.msra.mxu0 %v2648
        %2952 = vmatprep.subr.bf16.mxu0 %v2653
        %2953 = vmatpush1.bf16.msra.mxu0 %v2652
        %2954 = vmatprep.subr.bf16.mxu0 %v2657
        %2955 = vmatpush1.bf16.msra.mxu0 %v2656
        %2956 = vmatprep.subr.bf16.mxu0 %v2661
        %2957 = vmatpush1.bf16.msra.mxu0 %v2660
        %2958 = vmatprep.subr.bf16.mxu0 %v2665
        %2959 = vmatpush1.bf16.msra.mxu0 %v2664
        %2960 = vmatprep.subr.bf16.mxu0 %v2669
        %2961 = vmatpush1.bf16.msra.mxu0 %v2668
        %2962 = vmatprep.subr.bf16.mxu0 %v2673
        %2963 = vmatpush1.bf16.msra.mxu0 %v2672
        %2964 = vmatprep.mubr.bf16.mxu0 %v1946
        %2965 = vmatmul.mubr.bf16.gmra.mrb[0].mxu0 %v1945
        %v2966 = vpop.f32.mrb[0].mxu0
        %v2967 = vadd.f32 %v2115, %v2966
        %v2968 = vpop.f32.mrb[0].mxu0
        %v2969 = vadd.f32 %v2119, %v2968
        %v2970 = vpop.f32.mrb[0].mxu0
        %v2971 = vpop.f32.mrb[0].mxu0
        %2972 = vdwg.mxu0
        %2973 = vmatprep.subr.bf16.mxu0 %v2677
        %2974 = vmatpush1.bf16.msra.mxu0 %v2676
        %2975 = vmatprep.subr.bf16.mxu0 %v2681
        %2976 = vmatpush1.bf16.msra.mxu0 %v2680
        %2977 = vmatprep.subr.bf16.mxu0 %v2685
        %2978 = vmatpush1.bf16.msra.mxu0 %v2684
        %2979 = vmatprep.subr.bf16.mxu0 %v2689
        %2980 = vmatpush1.bf16.msra.mxu0 %v2688
        %2981 = vmatprep.subr.bf16.mxu0 %v2693
        %2982 = vmatpush1.bf16.msra.mxu0 %v2692
        %2983 = vmatprep.subr.bf16.mxu0 %v2697
        %2984 = vmatpush1.bf16.msra.mxu0 %v2696
        %2985 = vmatprep.subr.bf16.mxu0 %v2701
        %2986 = vmatpush1.bf16.msra.mxu0 %v2700
        %2987 = vmatprep.subr.bf16.mxu0 %v2705
        %2988 = vmatpush1.bf16.msra.mxu0 %v2704
        %2989 = vmatprep.subr.bf16.mxu0 %v2709
        %2990 = vmatpush1.bf16.msra.mxu0 %v2708
        %2991 = vmatprep.subr.bf16.mxu0 %v2713
        %2992 = vmatpush1.bf16.msra.mxu0 %v2712
        %2993 = vmatprep.subr.bf16.mxu0 %v2717
        %2994 = vmatpush1.bf16.msra.mxu0 %v2716
        %2995 = vmatprep.subr.bf16.mxu0 %v2721
        %2996 = vmatpush1.bf16.msra.mxu0 %v2720
        %2997 = vmatprep.subr.bf16.mxu0 %v2725
        %2998 = vmatpush1.bf16.msra.mxu0 %v2724
        %2999 = vmatprep.subr.bf16.mxu0 %v2729
        %3000 = vmatpush1.bf16.msra.mxu0 %v2728
        %3001 = vmatprep.subr.bf16.mxu0 %v2733
        %3002 = vmatpush1.bf16.msra.mxu0 %v2732
        %3003 = vmatprep.subr.bf16.mxu0 %v2737
        %3004 = vmatpush1.bf16.msra.mxu0 %v2736
        %3005 = vmatprep.mubr.bf16.mxu0 %v1948
        %3006 = vmatmul.mubr.bf16.gmra.mrb[0].mxu0 %v1947
        %v3007 = vpop.f32.mrb[0].mxu0
        %v3008 = vadd.f32 %v2967, %v3007
        %v3009 = vpop.f32.mrb[0].mxu0
        %v3010 = vadd.f32 %v2969, %v3009
        %v3011 = vpop.f32.mrb[0].mxu0
        %v3012 = vpop.f32.mrb[0].mxu0
        %3013 = vdwg.mxu0
        %3014 = vmatprep.subr.bf16.mxu0 %v2741
        %3015 = vmatpush1.bf16.msra.mxu0 %v2740
        %3016 = vmatprep.subr.bf16.mxu0 %v2745
        %3017 = vmatpush1.bf16.msra.mxu0 %v2744
        %3018 = vmatprep.subr.bf16.mxu0 %v2749
        %3019 = vmatpush1.bf16.msra.mxu0 %v2748
        %3020 = vmatprep.subr.bf16.mxu0 %v2753
        %3021 = vmatpush1.bf16.msra.mxu0 %v2752
        %3022 = vmatprep.subr.bf16.mxu0 %v2757
        %3023 = vmatpush1.bf16.msra.mxu0 %v2756
        %3024 = vmatprep.subr.bf16.mxu0 %v2761
        %3025 = vmatpush1.bf16.msra.mxu0 %v2760
        %3026 = vmatprep.subr.bf16.mxu0 %v2765
        %3027 = vmatpush1.bf16.msra.mxu0 %v2764
        %3028 = vmatprep.subr.bf16.mxu0 %v2769
        %3029 = vmatpush1.bf16.msra.mxu0 %v2768
        %3030 = vmatprep.subr.bf16.mxu0 0
        %3031 = vmatpush1.bf16.msra.mxu0 0
        %3032 = vmatprep.subr.bf16.mxu0 0
        %3033 = vmatpush1.bf16.msra.mxu0 0
        %3034 = vmatprep.subr.bf16.mxu0 0
        %3035 = vmatpush1.bf16.msra.mxu0 0
        %3036 = vmatprep.subr.bf16.mxu0 0
        %3037 = vmatpush1.bf16.msra.mxu0 0
        %3038 = vmatprep.subr.bf16.mxu0 0
        %3039 = vmatpush1.bf16.msra.mxu0 0
        %3040 = vmatprep.subr.bf16.mxu0 0
        %3041 = vmatpush1.bf16.msra.mxu0 0
        %3042 = vmatprep.subr.bf16.mxu0 0
        %3043 = vmatpush1.bf16.msra.mxu0 0
        %3044 = vmatprep.subr.bf16.mxu0 0
        %3045 = vmatpush1.bf16.msra.mxu0 0
        %3046 = vmatprep.mubr.bf16.mxu0 0
        %3047 = vmatmul.mubr.bf16.gmra.mrb[0].mxu0 %v1949
        %v3048 = vpop.f32.mrb[0].mxu0
        %v3049 = vadd.f32 %v3008, %v3048
        %v3050 = vpop.f32.mrb[0].mxu0
        %v3051 = vadd.f32 %v3010, %v3050
        %v3052 = vpop.f32.mrb[0].mxu0
        %v3053 = vpop.f32.mrb[0].mxu0
        %3054 = vdwg.mxu0
        %3055 = vmatprep.subr.bf16.mxu0 %v2615
        %3056 = vmatpush1.bf16.msra.mxu0 %v2614
        %3057 = vmatprep.subr.bf16.mxu0 %v2619
        %3058 = vmatpush1.bf16.msra.mxu0 %v2618
        %3059 = vmatprep.subr.bf16.mxu0 %v2623
        %3060 = vmatpush1.bf16.msra.mxu0 %v2622
        %3061 = vmatprep.subr.bf16.mxu0 %v2627
        %3062 = vmatpush1.bf16.msra.mxu0 %v2626
        %3063 = vmatprep.subr.bf16.mxu0 %v2631
        %3064 = vmatpush1.bf16.msra.mxu0 %v2630
        %3065 = vmatprep.subr.bf16.mxu0 %v2635
        %3066 = vmatpush1.bf16.msra.mxu0 %v2634
        %3067 = vmatprep.subr.bf16.mxu0 %v2639
        %3068 = vmatpush1.bf16.msra.mxu0 %v2638
        %3069 = vmatprep.subr.bf16.mxu0 %v2643
        %3070 = vmatpush1.bf16.msra.mxu0 %v2642
        %3071 = vmatprep.subr.bf16.mxu0 %v2647
        %3072 = vmatpush1.bf16.msra.mxu0 %v2646
        %3073 = vmatprep.subr.bf16.mxu0 %v2651
        %3074 = vmatpush1.bf16.msra.mxu0 %v2650
        %3075 = vmatprep.subr.bf16.mxu0 %v2655
        %3076 = vmatpush1.bf16.msra.mxu0 %v2654
        %3077 = vmatprep.subr.bf16.mxu0 %v2659
        %3078 = vmatpush1.bf16.msra.mxu0 %v2658
        %3079 = vmatprep.subr.bf16.mxu0 %v2663
        %3080 = vmatpush1.bf16.msra.mxu0 %v2662
        %3081 = vmatprep.subr.bf16.mxu0 %v2667
        %3082 = vmatpush1.bf16.msra.mxu0 %v2666
        %3083 = vmatprep.subr.bf16.mxu0 %v2671
        %3084 = vmatpush1.bf16.msra.mxu0 %v2670
        %3085 = vmatprep.subr.bf16.mxu0 %v2675
        %3086 = vmatpush1.bf16.msra.mxu0 %v2674
        %3087 = vmatprep.mubr.bf16.mxu0 %v1946
        %3088 = vmatmul.mubr.bf16.gmra.mrb[0].mxu0 %v1945
        %v3089 = vpop.f32.mrb[0].mxu0
        %v3090 = vadd.f32 %v2123, %v3089
        %v3091 = vpop.f32.mrb[0].mxu0
        %v3092 = vadd.f32 %v2127, %v3091
        %v3093 = vpop.f32.mrb[0].mxu0
        %v3094 = vpop.f32.mrb[0].mxu0
        %3095 = vdwg.mxu0
        %3096 = vmatprep.subr.bf16.mxu0 %v2679
        %3097 = vmatpush1.bf16.msra.mxu0 %v2678
        %3098 = vmatprep.subr.bf16.mxu0 %v2683
        %3099 = vmatpush1.bf16.msra.mxu0 %v2682
        %3100 = vmatprep.subr.bf16.mxu0 %v2687
        %3101 = vmatpush1.bf16.msra.mxu0 %v2686
        %3102 = vmatprep.subr.bf16.mxu0 %v2691
        %3103 = vmatpush1.bf16.msra.mxu0 %v2690
        %3104 = vmatprep.subr.bf16.mxu0 %v2695
        %3105 = vmatpush1.bf16.msra.mxu0 %v2694
        %3106 = vmatprep.subr.bf16.mxu0 %v2699
        %3107 = vmatpush1.bf16.msra.mxu0 %v2698
        %3108 = vmatprep.subr.bf16.mxu0 %v2703
        %3109 = vmatpush1.bf16.msra.mxu0 %v2702
        %3110 = vmatprep.subr.bf16.mxu0 %v2707
        %3111 = vmatpush1.bf16.msra.mxu0 %v2706
        %3112 = vmatprep.subr.bf16.mxu0 %v2711
        %3113 = vmatpush1.bf16.msra.mxu0 %v2710
        %3114 = vmatprep.subr.bf16.mxu0 %v2715
        %3115 = vmatpush1.bf16.msra.mxu0 %v2714
        %3116 = vmatprep.subr.bf16.mxu0 %v2719
        %3117 = vmatpush1.bf16.msra.mxu0 %v2718
        %3118 = vmatprep.subr.bf16.mxu0 %v2723
        %3119 = vmatpush1.bf16.msra.mxu0 %v2722
        %3120 = vmatprep.subr.bf16.mxu0 %v2727
        %3121 = vmatpush1.bf16.msra.mxu0 %v2726
        %3122 = vmatprep.subr.bf16.mxu0 %v2731
        %3123 = vmatpush1.bf16.msra.mxu0 %v2730
        %3124 = vmatprep.subr.bf16.mxu0 %v2735
        %3125 = vmatpush1.bf16.msra.mxu0 %v2734
        %3126 = vmatprep.subr.bf16.mxu0 %v2739
        %3127 = vmatpush1.bf16.msra.mxu0 %v2738
        %3128 = vmatprep.mubr.bf16.mxu0 %v1948
        %3129 = vmatmul.mubr.bf16.gmra.mrb[0].mxu0 %v1947
        %v3130 = vpop.f32.mrb[0].mxu0
        %v3131 = vadd.f32 %v3090, %v3130
        %v3132 = vpop.f32.mrb[0].mxu0
        %v3133 = vadd.f32 %v3092, %v3132
        %v3134 = vpop.f32.mrb[0].mxu0
        %v3135 = vpop.f32.mrb[0].mxu0
        %3136 = vdwg.mxu0
        %3137 = vmatprep.subr.bf16.mxu0 %v2743
        %3138 = vmatpush1.bf16.msra.mxu0 %v2742
        %3139 = vmatprep.subr.bf16.mxu0 %v2747
        %3140 = vmatpush1.bf16.msra.mxu0 %v2746
        %3141 = vmatprep.subr.bf16.mxu0 %v2751
        %3142 = vmatpush1.bf16.msra.mxu0 %v2750
        %3143 = vmatprep.subr.bf16.mxu0 %v2755
        %3144 = vmatpush1.bf16.msra.mxu0 %v2754
        %3145 = vmatprep.subr.bf16.mxu0 %v2759
        %3146 = vmatpush1.bf16.msra.mxu0 %v2758
        %3147 = vmatprep.subr.bf16.mxu0 %v2763
        %3148 = vmatpush1.bf16.msra.mxu0 %v2762
        %3149 = vmatprep.subr.bf16.mxu0 %v2767
        %3150 = vmatpush1.bf16.msra.mxu0 %v2766
        %3151 = vmatprep.subr.bf16.mxu0 %v2771
        %3152 = vmatpush1.bf16.msra.mxu0 %v2770
        %3153 = vmatprep.subr.bf16.mxu0 0
        %3154 = vmatpush1.bf16.msra.mxu0 0
        %3155 = vmatprep.subr.bf16.mxu0 0
        %3156 = vmatpush1.bf16.msra.mxu0 0
        %3157 = vmatprep.subr.bf16.mxu0 0
        %3158 = vmatpush1.bf16.msra.mxu0 0
        %3159 = vmatprep.subr.bf16.mxu0 0
        %3160 = vmatpush1.bf16.msra.mxu0 0
        %3161 = vmatprep.subr.bf16.mxu0 0
        %3162 = vmatpush1.bf16.msra.mxu0 0
        %3163 = vmatprep.subr.bf16.mxu0 0
        %3164 = vmatpush1.bf16.msra.mxu0 0
        %3165 = vmatprep.subr.bf16.mxu0 0
        %3166 = vmatpush1.bf16.msra.mxu0 0
        %3167 = vmatprep.subr.bf16.mxu0 0
        %3168 = vmatpush1.bf16.msra.mxu0 0
        %3169 = vmatprep.mubr.bf16.mxu0 0
        %3170 = vmatmul.mubr.bf16.gmra.mrb[0].mxu0 %v1949
        %v3171 = vpop.f32.mrb[0].mxu0
        %v3172 = vadd.f32 %v3131, %v3171
        %v3173 = vpop.f32.mrb[0].mxu0
        %v3174 = vadd.f32 %v3133, %v3173
        %v3175 = vpop.f32.mrb[0].mxu0
        %v3176 = vpop.f32.mrb[0].mxu0
        %3177 = vdwg.mxu0
        %s3178 = sld [smem:[#allocation2 + $0x1]]
        %vm3179 = vcmp.ge.f32.partialorder %v3049, 0.0
        %vm3180 = vcmp.ge.f32.partialorder %v3051, 0.0
        %vm3181 = vcmp.ge.f32.partialorder %v3172, 0.0
        %vm3182 = vcmp.ge.f32.partialorder %v3174, 0.0
        %v3183 = vstv %s3178
        %v3184 = vmul.f32 %v3183, %v3049
        %v3185 = vmul.f32 %v3183, %v3051
        %v3186 = vmul.f32 %v3183, %v3172
        %v3187 = vmul.f32 %v3183, %v3174
        %v3188 = vsel %vm3179, %v3049, %v3184
        %v3189 = vsel %vm3180, %v3051, %v3185
        %v3190 = vsel %vm3181, %v3172, %v3186
        %v3191 = vsel %vm3182, %v3174, %v3187
        %v3192 = vpack.c.bf16 %v3188, %v3188
        %v3193 = vpack.c.bf16 %v3189, %v3189
        %v3194 = vpack.c.bf16 %v3190, %v3190
        %v3195 = vpack.c.bf16 %v3191, %v3191
        %v3200 = vunpack.c.l.b16 %v3192
        %v3201 = vunpack.c.l.b16 %v3193
        %v3202 = vunpack.c.l.b16 %v3194
        %v3203 = vunpack.c.l.b16 %v3195
        %v3204 = vpack.c.b16 %v3201, %v3200
        %v3205 = vpack.c.b16 %v3203, %v3202
        %3208 = vst [vmem:[%s413] sm:$0xff] %v3204
        %3209 = vst [vmem:[%s413 + $0x8] sm:$0xff] %v3205
        %s3210 = sand.u32 %s216, 1
        %s3211 = scalar_lea.sflag [#allocation4], %s3210
        %s3212 = sand.u32 %s216, 1
        %s3213 = smul.addr %s3212, 16
        %s3214 = scalar_lea.vmem [#allocation13], %s3213
        // Predicated region
        $region77: #{tpu_custom_call.1} parent=51 // pred_check
          %p3215 = pneg %p226
        $region78: #{tpu_custom_call.1} parent=51 // pred_check_branch
          %3217 = sbr.rel (%p3215) target = $region80
        $region79: #{tpu_custom_call.1} parent=51 // pred_region
          %s3219 = ssub.s32 256, 256
          %3220 = vsyncadd %s3211, %s3219
          %s3221 = smul.addr %s30, 4
          %s3222 = smul.addr %s3221, 64
          %s3223 = scalar_lea.hbm %s8, %s3222
          %s3225 = sshll.u32 %s3214, 4
          %s3226 = int_to_ptr.vmem [resolvable:$true] %s3225
          %3228 = dma.vmem_to_hbm [thread:$0]  %s3226, 256, %s3223, %s3211
        $region80: #{tpu_custom_call.1} parent=51 // pred_fallthru
          _
      $region52: #{tpu_custom_call.1} parent=5 // pred_fallthru
        _
      %p3229 = scmp.le.s32.totalorder 2, %s25
      // Predicated region
      $region81: #{tpu_custom_call.1} parent=5 // pred_check
        %p3230 = pneg %p3229
      $region82: #{tpu_custom_call.1} parent=5 // pred_check_branch
        %3232 = sbr.rel (%p3230) target = $region84
      $region83: #{tpu_custom_call.1} parent=5 // pred_region
        %s3233 = ssub.s32 %s25, 2
        // Predicated region
        $region85: #{tpu_custom_call.1} parent=83 // pred_check
          %p3234 = pneg %p232
        $region86: #{tpu_custom_call.1} parent=83 // pred_check_branch
          %3236 = sbr.rel (%p3234) target = $region88
        $region87: #{tpu_custom_call.1} parent=83 // pred_region
          %s3237 = sand.u32 %s217, 1
          %s3238 = scalar_lea.sflag [#allocation4], %s3237
          %s3239 = sand.u32 %s217, 1
          %s3240 = smul.addr %s3239, 16
          %s3241 = scalar_lea.vmem [#allocation13], %s3240
          %3242 = dma.done %s3238, 256
        $region88: #{tpu_custom_call.1} parent=83 // pred_fallthru
          _
      $region84: #{tpu_custom_call.1} parent=5 // pred_fallthru
        _
    $region6: #{tpu_custom_call.1} parent=1 // loop_footer
      %s29 = sadd.s32 1, %s25
    $region7: #{tpu_custom_call.1} parent=1 // loop_footer_branch
      %24 = sbr.rel target = $region3
    $region8: #{tpu_custom_call.1} parent=1 // loop_exit
      _
    %3243 = vsyncpa [#allocation3], 1
    %s3244 = scalar_lea.sflag [#allocation3], 1
    %3245 = vsyncpa %s3244, 1
    %3246 = vsyncpa [#allocation8], 1
    %s3247 = scalar_lea.sflag [#allocation8], 1
    %3248 = vsyncpa %s3247, 1
    %3249 = vsyncpa [#allocation11], 1
    %3250 = vsyncpa [#allocation4], 1
    %s3251 = scalar_lea.sflag [#allocation4], 1
    %3252 = vsyncpa %s3251, 1
    %3253 = vsyncpa [#allocation5], 1
    %s3254 = scalar_lea.sflag [#allocation5], 1
    %3255 = vsyncpa %s3254, 1

</llo_original>
